<compile_context>
chip_gen: v7x
topology: tpu7x:2x2x1
jax: 0.10.0
libtpu: 0.0.40
codegen_flags: <defaults>
</compile_context>

<pallas_src>
import functools

import jax
import jax.numpy as jnp
from jax import lax
from jax.experimental import pallas as pl
from jax.experimental.pallas import tpu as pltpu


def _gru_chunk_kernel(CT,
                      gi_r_ref, gi_z_ref, gi_n_ref,     # (CT, H) precomputed input-proj gates
                      h0_ref,                           # (1, H)  initial hidden (resident)
                      whh_r_ref, whh_z_ref, whh_n_ref,  # (H, H)  recurrent weights (resident)
                      bhh_r_ref, bhh_z_ref, bhh_n_ref,  # (1, H)  recurrent biases  (resident)
                      out_ref,                          # (CT, H) per-chunk outputs
                      h_sc):                            # (1, H)  VMEM scratch: hidden carry
    f32 = jnp.float32

    @pl.when(pl.program_id(0) == 0)
    def _():
        h_sc[...] = h0_ref[...]

    def step(s, h):
        # Sequential part only: gh = h @ Whh + b_hh, per gate (lane-aligned results).
        ghr = jnp.dot(h, whh_r_ref[...], preferred_element_type=f32) + bhh_r_ref[...]
        ghz = jnp.dot(h, whh_z_ref[...], preferred_element_type=f32) + bhh_z_ref[...]
        ghn = jnp.dot(h, whh_n_ref[...], preferred_element_type=f32) + bhh_n_ref[...]
        r = jax.nn.sigmoid(gi_r_ref[pl.ds(s, 1), :] + ghr)
        z = jax.nn.sigmoid(gi_z_ref[pl.ds(s, 1), :] + ghz)
        n = jnp.tanh(gi_n_ref[pl.ds(s, 1), :] + r * ghn)
        h_new = (1.0 - z) * n + z * h                    # (1, H)
        out_ref[pl.ds(s, 1), :] = h_new                  # buffered in VMEM; one HBM DMA per chunk
        return h_new

    h_final = lax.fori_loop(0, CT, step, h_sc[...], unroll=True)
    h_sc[...] = h_final                                  # carry to next chunk (stays in VMEM)


def pack_params(params):
    """One-time host-side repack into kernel/wrapper layout (gate order [r, z, n])."""
    wih = params["gru_wih"]        # (3H, H)
    whh = params["gru_whh"]        # (3H, H)
    bih = params["gru_bih"]        # (3H,)
    bhh = params["gru_bhh"]        # (3H,)
    H = wih.shape[1]
    return {
        "embedding": params["embedding"],                # (V, H)
        "wih_t": wih.T,                                  # (H, 3H) for the batched input projection
        "bih": bih.reshape(1, 3 * H),
        "whh_r": whh[0 * H:1 * H].T,                     # (H, H)
        "whh_z": whh[1 * H:2 * H].T,
        "whh_n": whh[2 * H:3 * H].T,
        "bhh_r": bhh[0 * H:1 * H].reshape(1, H),
        "bhh_z": bhh[1 * H:2 * H].reshape(1, H),
        "bhh_n": bhh[2 * H:3 * H].reshape(1, H),
    }


def _chunk_size(T):
    # timesteps per grid step: multiple of 8 (sublane tiling), capped at 32
    ct = 8 * ((T + 7) // 8)
    return min(ct, 32)


@jax.jit
def encode_rnn_forward(tokens, hidden, packed):
    """Encode a token sequence: equivalent to T chained EncodeRNN.forward calls.

    tokens : (T,) int32 token ids
    hidden : (1, 1, H) initial hidden state (initHidden() -> zeros)
    returns: outputs (T, 1, H), final hidden (1, 1, H)
    """
    H = hidden.shape[-1]
    T = tokens.shape[0]
    CT = _chunk_size(T)
    T_pad = CT * ((T + CT - 1) // CT)
    f32 = jnp.float32

    h0 = hidden.reshape(1, H).astype(f32)

    # ---- Phase 1 (non-recurrent, batched in XLA): GI = Emb[tokens] @ Wih^T + b_ih ----
    emb_x = jnp.take(packed["embedding"], tokens, axis=0, mode="clip")       # (T, H)
    gi = jnp.dot(emb_x, packed["wih_t"], preferred_element_type=f32) + packed["bih"]
    gi_r, gi_z, gi_n = gi[:, :H], gi[:, H:2 * H], gi[:, 2 * H:]

    pad = T_pad - T
    if pad:
        gi_r = jnp.pad(gi_r, ((0, pad), (0, 0)))
        gi_z = jnp.pad(gi_z, ((0, pad), (0, 0)))
        gi_n = jnp.pad(gi_n, ((0, pad), (0, 0)))

    # ---- Phase 2 (recurrent Pallas kernel, CT timesteps per grid step) ----
    block_floats = 4 * CT * H + 3 * H * H + 4 * H            # gi blocks + out + weights + biases
    vmem_limit = int(min(100 * (1 << 20), 2 * 2 * 4 * block_floats + (8 << 20)))

    const2d = lambda c: (0, 0)
    stream2d = lambda c: (c, 0)

    outputs_pad = pl.pallas_call(
        functools.partial(_gru_chunk_kernel, CT),
        grid_spec=pltpu.PrefetchScalarGridSpec(
            num_scalar_prefetch=0,
            grid=(T_pad // CT,),
            in_specs=[
                pl.BlockSpec((CT, H), stream2d),             # gi_r
                pl.BlockSpec((CT, H), stream2d),             # gi_z
                pl.BlockSpec((CT, H), stream2d),             # gi_n
                pl.BlockSpec((1, H), const2d),               # h0
                pl.BlockSpec((H, H), const2d),               # whh_r
                pl.BlockSpec((H, H), const2d),               # whh_z
                pl.BlockSpec((H, H), const2d),               # whh_n
                pl.BlockSpec((1, H), const2d),               # bhh_r
                pl.BlockSpec((1, H), const2d),               # bhh_z
                pl.BlockSpec((1, H), const2d),               # bhh_n
            ],
            out_specs=pl.BlockSpec((CT, H), stream2d),
            scratch_shapes=[pltpu.VMEM((1, H), f32)],        # hidden-state carry
        ),
        out_shape=jax.ShapeDtypeStruct((T_pad, H), f32),
        compiler_params=pltpu.CompilerParams(
            dimension_semantics=("arbitrary",),              # recurrence: time axis is sequential
            vmem_limit_bytes=vmem_limit),
    )(gi_r, gi_z, gi_n, h0,
      packed["whh_r"], packed["whh_z"], packed["whh_n"],
      packed["bhh_r"], packed["bhh_z"], packed["bhh_n"])

    outputs = outputs_pad[:T].reshape(T, 1, H)
    h_last = outputs_pad[T - 1].reshape(1, 1, H)             # single-layer GRU: last output == hidden
    return outputs, h_last


# -------------------------- pure-JAX reference -------------------------------
def gru_reference(tokens, hidden, params):
    H = hidden.shape[-1]
    wih, whh = params["gru_wih"], params["gru_whh"]          # (3H, H)
    bih, bhh = params["gru_bih"], params["gru_bhh"]          # (3H,)
    h = hidden.reshape(1, H)
    outs = []
    for tok in tokens:
        x = params["embedding"][tok].reshape(1, H)
        gi = x @ wih.T + bih
        gh = h @ whh.T + bhh
        r = jax.nn.sigmoid(gi[:, :H] + gh[:, :H])
        z = jax.nn.sigmoid(gi[:, H:2 * H] + gh[:, H:2 * H])
        n = jnp.tanh(gi[:, 2 * H:] + r * gh[:, 2 * H:])
        h = (1.0 - z) * n + z * h
        outs.append(h)
    return jnp.stack(outs), h.reshape(1, 1, H)               # (T, 1, H), (1, 1, H)


def init_params(key, input_size, hidden_size):
    H = hidden_size
    ks = jax.random.split(key, 5)
    s = 1.0 / float(jnp.sqrt(jnp.float32(H)))
    u = lambda k, shape: jax.random.uniform(k, shape, jnp.float32, -s, s)
    return {
        "embedding": jax.random.normal(ks[0], (input_size, H), jnp.float32),
        "gru_wih": u(ks[1], (3 * H, H)),   # PyTorch weight_ih_l0, gate order [r, z, n]
        "gru_whh": u(ks[2], (3 * H, H)),   # PyTorch weight_hh_l0
        "gru_bih": u(ks[3], (3 * H,)),
        "gru_bhh": u(ks[4], (3 * H,)),
    }


if __name__ == "__main__":
    V, H = 20, 32                           # input_size (vocab), hidden_size

    key = jax.random.PRNGKey(0)
    pkey, tkey1, tkey2 = jax.random.split(key, 3)

    params = init_params(pkey, V, H)
    packed = pack_params(params)            # one-time weight repack (outside the jitted step)

    hidden = jnp.zeros((1, 1, H), jnp.float32)               # EncodeRNN.initHidden()

    # Case 1: seq=8 (single chunk)
    tokens = jax.random.randint(tkey1, (8,), 0, V, dtype=jnp.int32)
    outputs, h_last = encode_rnn_forward(tokens, hidden, packed)
    jax.block_until_ready((outputs, h_last))
    assert outputs.shape == (8, 1, H) and h_last.shape == (1, 1, H)
    ref_out, ref_h = gru_reference(tokens, hidden, params)
    assert jnp.allclose(outputs, ref_out, atol=1e-5, rtol=1e-5)
    assert jnp.allclose(h_last, ref_h, atol=1e-5, rtol=1e-5)
    assert jnp.allclose(outputs[-1], h_last[0], atol=1e-6)

    # Case 2: seq=40 (multiple chunks + padding; hidden carried across grid steps)
    tokens2 = jax.random.randint(tkey2, (40,), 0, V, dtype=jnp.int32)
    outputs2, h_last2 = encode_rnn_forward(tokens2, hidden, packed)
    jax.block_until_ready((outputs2, h_last2))
    ref_out2, ref_h2 = gru_reference(tokens2, hidden, params)
    assert jnp.allclose(outputs2, ref_out2, atol=1e-5, rtol=1e-5)
    assert jnp.allclose(h_last2, ref_h2, atol=1e-5, rtol=1e-5)

    print("KERNEL_OK")
</pallas_src>

<mosaic_0001>
module attributes {stable_mosaic.version = 11 : i64} {
  func.func @_gru_chunk_kernel(%arg0: i32, %arg1: memref<8x32xf32, #tpu.memory_space<vmem>>, %arg2: memref<8x32xf32, #tpu.memory_space<vmem>>, %arg3: memref<8x32xf32, #tpu.memory_space<vmem>>, %arg4: memref<1x32xf32, #tpu.memory_space<vmem>>, %arg5: memref<32x32xf32, #tpu.memory_space<vmem>>, %arg6: memref<32x32xf32, #tpu.memory_space<vmem>>, %arg7: memref<32x32xf32, #tpu.memory_space<vmem>>, %arg8: memref<1x32xf32, #tpu.memory_space<vmem>>, %arg9: memref<1x32xf32, #tpu.memory_space<vmem>>, %arg10: memref<1x32xf32, #tpu.memory_space<vmem>>, %arg11: memref<8x32xf32, #tpu.memory_space<vmem>>, %arg12: memref<1x32xf32, #tpu.memory_space<vmem>>) attributes {dimension_semantics = [#tpu.dimension_semantics<arbitrary>], iteration_bounds = array<i64: 1>, scalar_prefetch = 0 : i64, scratch_operands = 1 : i64, tpu.core_type = #tpu.core_type<tc>, window_params = [{transform_indices = @transform_0, window_bounds = array<i64: 8, 32>}, {transform_indices = @transform_1, window_bounds = array<i64: 8, 32>}, {transform_indices = @transform_2, window_bounds = array<i64: 8, 32>}, {pipeline_mode = #tpu.pipeline_mode<synchronous>, transform_indices = @transform_3, window_bounds = array<i64: 1, 32>}, {pipeline_mode = #tpu.pipeline_mode<synchronous>, transform_indices = @transform_4, window_bounds = array<i64: 32, 32>}, {pipeline_mode = #tpu.pipeline_mode<synchronous>, transform_indices = @transform_5, window_bounds = array<i64: 32, 32>}, {pipeline_mode = #tpu.pipeline_mode<synchronous>, transform_indices = @transform_6, window_bounds = array<i64: 32, 32>}, {pipeline_mode = #tpu.pipeline_mode<synchronous>, transform_indices = @transform_7, window_bounds = array<i64: 1, 32>}, {pipeline_mode = #tpu.pipeline_mode<synchronous>, transform_indices = @transform_8, window_bounds = array<i64: 1, 32>}, {pipeline_mode = #tpu.pipeline_mode<synchronous>, transform_indices = @transform_9, window_bounds = array<i64: 1, 32>}, {transform_indices = @transform_10, window_bounds = array<i64: 8, 32>}]} {
    %c0_i32 = arith.constant 0 : i32
    %0 = arith.cmpi eq, %arg0, %c0_i32 : i32
    %1 = arith.extui %0 : i1 to i32
    %c0_i32_0 = arith.constant 0 : i32
    %2 = arith.cmpi ne, %1, %c0_i32_0 : i32
    scf.if %2 {
      %c0_180 = arith.constant 0 : index
      %c0_181 = arith.constant 0 : index
      %325 = vector.load %arg4[%c0_180, %c0_181] : memref<1x32xf32, #tpu.memory_space<vmem>>, vector<1x32xf32>
      %c0_182 = arith.constant 0 : index
      %c0_183 = arith.constant 0 : index
      %326 = vector.load %arg12[%c0_182, %c0_183] : memref<1x32xf32, #tpu.memory_space<vmem>>, vector<1x32xf32>
      tpu.vector_store %arg12[%c0_182, %c0_183], %325 {strides = array<i32>} : memref<1x32xf32, #tpu.memory_space<vmem>>, vector<1x32xf32>,
    } else {
    }
    %c0 = arith.constant 0 : index
    %c0_1 = arith.constant 0 : index
    %3 = vector.load %arg12[%c0, %c0_1] : memref<1x32xf32, #tpu.memory_space<vmem>>, vector<1x32xf32>
    %c0_i32_2 = arith.constant 0 : i32
    %c0_3 = arith.constant 0 : index
    %c0_4 = arith.constant 0 : index
    %4 = vector.load %arg5[%c0_3, %c0_4] : memref<32x32xf32, #tpu.memory_space<vmem>>, vector<32x32xf32>
    %cst = arith.constant dense<0.000000e+00> : vector<1x32xf32>
    %5 = tpu.matmul %3, %4, %cst {dimension_numbers = #tpu.dot_dimension_numbers<[1], [0], [0], [1], [0, 0, 1, 1], [], []>} : vector<1x32xf32>, vector<32x32xf32>, vector<1x32xf32> -> vector<1x32xf32>
    %c0_5 = arith.constant 0 : index
    %c0_6 = arith.constant 0 : index
    %6 = vector.load %arg8[%c0_5, %c0_6] : memref<1x32xf32, #tpu.memory_space<vmem>>, vector<1x32xf32>
    %7 = arith.addf %5, %6 : vector<1x32xf32>
    %c0_7 = arith.constant 0 : index
    %c0_8 = arith.constant 0 : index
    %8 = vector.load %arg6[%c0_7, %c0_8] : memref<32x32xf32, #tpu.memory_space<vmem>>, vector<32x32xf32>
    %cst_9 = arith.constant dense<0.000000e+00> : vector<1x32xf32>
    %9 = tpu.matmul %3, %8, %cst_9 {dimension_numbers = #tpu.dot_dimension_numbers<[1], [0], [0], [1], [0, 0, 1, 1], [], []>} : vector<1x32xf32>, vector<32x32xf32>, vector<1x32xf32> -> vector<1x32xf32>
    %c0_10 = arith.constant 0 : index
    %c0_11 = arith.constant 0 : index
    %10 = vector.load %arg9[%c0_10, %c0_11] : memref<1x32xf32, #tpu.memory_space<vmem>>, vector<1x32xf32>
    %11 = arith.addf %9, %10 : vector<1x32xf32>
    %c0_12 = arith.constant 0 : index
    %c0_13 = arith.constant 0 : index
    %12 = vector.load %arg7[%c0_12, %c0_13] : memref<32x32xf32, #tpu.memory_space<vmem>>, vector<32x32xf32>
    %cst_14 = arith.constant dense<0.000000e+00> : vector<1x32xf32>
    %13 = tpu.matmul %3, %12, %cst_14 {dimension_numbers = #tpu.dot_dimension_numbers<[1], [0], [0], [1], [0, 0, 1, 1], [], []>} : vector<1x32xf32>, vector<32x32xf32>, vector<1x32xf32> -> vector<1x32xf32>
    %c0_15 = arith.constant 0 : index
    %c0_16 = arith.constant 0 : index
    %14 = vector.load %arg10[%c0_15, %c0_16] : memref<1x32xf32, #tpu.memory_space<vmem>>, vector<1x32xf32>
    %15 = arith.addf %13, %14 : vector<1x32xf32>
    %16 = arith.index_cast %c0_i32_2 : i32 to index
    %c0_17 = arith.constant 0 : index
    %17 = vector.load %arg1[%16, %c0_17] : memref<8x32xf32, #tpu.memory_space<vmem>>, vector<1x32xf32>
    %18 = arith.addf %17, %7 : vector<1x32xf32>
    %19 = arith.negf %18 : vector<1x32xf32>
    %20 = math.exp %19 : vector<1x32xf32>
    %cst_18 = arith.constant 1.000000e+00 : f32
    %21 = vector.broadcast %cst_18 : f32 to vector<1x32xf32>
    %22 = arith.addf %21, %20 : vector<1x32xf32>
    %23 = arith.divf %21, %22 : vector<1x32xf32>
    %24 = arith.index_cast %c0_i32_2 : i32 to index
    %c0_19 = arith.constant 0 : index
    %25 = vector.load %arg2[%24, %c0_19] : memref<8x32xf32, #tpu.memory_space<vmem>>, vector<1x32xf32>
    %26 = arith.addf %25, %11 : vector<1x32xf32>
    %27 = arith.negf %26 : vector<1x32xf32>
    %28 = math.exp %27 : vector<1x32xf32>
    %cst_20 = arith.constant 1.000000e+00 : f32
    %29 = vector.broadcast %cst_20 : f32 to vector<1x32xf32>
    %30 = arith.addf %29, %28 : vector<1x32xf32>
    %31 = arith.divf %29, %30 : vector<1x32xf32>
    %32 = arith.index_cast %c0_i32_2 : i32 to index
    %c0_21 = arith.constant 0 : index
    %33 = vector.load %arg3[%32, %c0_21] : memref<8x32xf32, #tpu.memory_space<vmem>>, vector<1x32xf32>
    %34 = arith.mulf %23, %15 : vector<1x32xf32>
    %35 = arith.addf %33, %34 : vector<1x32xf32>
    %36 = math.tanh %35 : vector<1x32xf32>
    %cst_22 = arith.constant 1.000000e+00 : f32
    %37 = vector.broadcast %cst_22 : f32 to vector<1x32xf32>
    %38 = arith.subf %37, %31 : vector<1x32xf32>
    %39 = arith.mulf %38, %36 : vector<1x32xf32>
    %40 = arith.mulf %31, %3 : vector<1x32xf32>
    %41 = arith.addf %39, %40 : vector<1x32xf32>
    %42 = arith.index_cast %c0_i32_2 : i32 to index
    %c0_23 = arith.constant 0 : index
    %43 = vector.load %arg11[%42, %c0_23] : memref<8x32xf32, #tpu.memory_space<vmem>>, vector<1x32xf32>
    tpu.vector_store %arg11[%42, %c0_23], %41 {strides = array<i32>} : memref<8x32xf32, #tpu.memory_space<vmem>>, vector<1x32xf32>,
    %c1_i32 = arith.constant 1 : i32
    %c0_24 = arith.constant 0 : index
    %c0_25 = arith.constant 0 : index
    %44 = vector.load %arg5[%c0_24, %c0_25] : memref<32x32xf32, #tpu.memory_space<vmem>>, vector<32x32xf32>
    %cst_26 = arith.constant dense<0.000000e+00> : vector<1x32xf32>
    %45 = tpu.matmul %41, %44, %cst_26 {dimension_numbers = #tpu.dot_dimension_numbers<[1], [0], [0], [1], [0, 0, 1, 1], [], []>} : vector<1x32xf32>, vector<32x32xf32>, vector<1x32xf32> -> vector<1x32xf32>
    %c0_27 = arith.constant 0 : index
    %c0_28 = arith.constant 0 : index
    %46 = vector.load %arg8[%c0_27, %c0_28] : memref<1x32xf32, #tpu.memory_space<vmem>>, vector<1x32xf32>
    %47 = arith.addf %45, %46 : vector<1x32xf32>
    %c0_29 = arith.constant 0 : index
    %c0_30 = arith.constant 0 : index
    %48 = vector.load %arg6[%c0_29, %c0_30] : memref<32x32xf32, #tpu.memory_space<vmem>>, vector<32x32xf32>
    %cst_31 = arith.constant dense<0.000000e+00> : vector<1x32xf32>
    %49 = tpu.matmul %41, %48, %cst_31 {dimension_numbers = #tpu.dot_dimension_numbers<[1], [0], [0], [1], [0, 0, 1, 1], [], []>} : vector<1x32xf32>, vector<32x32xf32>, vector<1x32xf32> -> vector<1x32xf32>
    %c0_32 = arith.constant 0 : index
    %c0_33 = arith.constant 0 : index
    %50 = vector.load %arg9[%c0_32, %c0_33] : memref<1x32xf32, #tpu.memory_space<vmem>>, vector<1x32xf32>
    %51 = arith.addf %49, %50 : vector<1x32xf32>
    %c0_34 = arith.constant 0 : index
    %c0_35 = arith.constant 0 : index
    %52 = vector.load %arg7[%c0_34, %c0_35] : memref<32x32xf32, #tpu.memory_space<vmem>>, vector<32x32xf32>
    %cst_36 = arith.constant dense<0.000000e+00> : vector<1x32xf32>
    %53 = tpu.matmul %41, %52, %cst_36 {dimension_numbers = #tpu.dot_dimension_numbers<[1], [0], [0], [1], [0, 0, 1, 1], [], []>} : vector<1x32xf32>, vector<32x32xf32>, vector<1x32xf32> -> vector<1x32xf32>
    %c0_37 = arith.constant 0 : index
    %c0_38 = arith.constant 0 : index
    %54 = vector.load %arg10[%c0_37, %c0_38] : memref<1x32xf32, #tpu.memory_space<vmem>>, vector<1x32xf32>
    %55 = arith.addf %53, %54 : vector<1x32xf32>
    %56 = arith.index_cast %c1_i32 : i32 to index
    %c0_39 = arith.constant 0 : index
    %57 = vector.load %arg1[%56, %c0_39] : memref<8x32xf32, #tpu.memory_space<vmem>>, vector<1x32xf32>
    %58 = arith.addf %57, %47 : vector<1x32xf32>
    %59 = arith.negf %58 : vector<1x32xf32>
    %60 = math.exp %59 : vector<1x32xf32>
    %cst_40 = arith.constant 1.000000e+00 : f32
    %61 = vector.broadcast %cst_40 : f32 to vector<1x32xf32>
    %62 = arith.addf %61, %60 : vector<1x32xf32>
    %63 = arith.divf %61, %62 : vector<1x32xf32>
    %64 = arith.index_cast %c1_i32 : i32 to index
    %c0_41 = arith.constant 0 : index
    %65 = vector.load %arg2[%64, %c0_41] : memref<8x32xf32, #tpu.memory_space<vmem>>, vector<1x32xf32>
    %66 = arith.addf %65, %51 : vector<1x32xf32>
    %67 = arith.negf %66 : vector<1x32xf32>
    %68 = math.exp %67 : vector<1x32xf32>
    %cst_42 = arith.constant 1.000000e+00 : f32
    %69 = vector.broadcast %cst_42 : f32 to vector<1x32xf32>
    %70 = arith.addf %69, %68 : vector<1x32xf32>
    %71 = arith.divf %69, %70 : vector<1x32xf32>
    %72 = arith.index_cast %c1_i32 : i32 to index
    %c0_43 = arith.constant 0 : index
    %73 = vector.load %arg3[%72, %c0_43] : memref<8x32xf32, #tpu.memory_space<vmem>>, vector<1x32xf32>
    %74 = arith.mulf %63, %55 : vector<1x32xf32>
    %75 = arith.addf %73, %74 : vector<1x32xf32>
    %76 = math.tanh %75 : vector<1x32xf32>
    %cst_44 = arith.constant 1.000000e+00 : f32
    %77 = vector.broadcast %cst_44 : f32 to vector<1x32xf32>
    %78 = arith.subf %77, %71 : vector<1x32xf32>
    %79 = arith.mulf %78, %76 : vector<1x32xf32>
    %80 = arith.mulf %71, %41 : vector<1x32xf32>
    %81 = arith.addf %79, %80 : vector<1x32xf32>
    %82 = arith.index_cast %c1_i32 : i32 to index
    %c0_45 = arith.constant 0 : index
    %83 = vector.load %arg11[%82, %c0_45] : memref<8x32xf32, #tpu.memory_space<vmem>>, vector<1x32xf32>
    tpu.vector_store %arg11[%82, %c0_45], %81 {strides = array<i32>} : memref<8x32xf32, #tpu.memory_space<vmem>>, vector<1x32xf32>,
    %c2_i32 = arith.constant 2 : i32
    %c0_46 = arith.constant 0 : index
    %c0_47 = arith.constant 0 : index
    %84 = vector.load %arg5[%c0_46, %c0_47] : memref<32x32xf32, #tpu.memory_space<vmem>>, vector<32x32xf32>
    %cst_48 = arith.constant dense<0.000000e+00> : vector<1x32xf32>
    %85 = tpu.matmul %81, %84, %cst_48 {dimension_numbers = #tpu.dot_dimension_numbers<[1], [0], [0], [1], [0, 0, 1, 1], [], []>} : vector<1x32xf32>, vector<32x32xf32>, vector<1x32xf32> -> vector<1x32xf32>
    %c0_49 = arith.constant 0 : index
    %c0_50 = arith.constant 0 : index
    %86 = vector.load %arg8[%c0_49, %c0_50] : memref<1x32xf32, #tpu.memory_space<vmem>>, vector<1x32xf32>
    %87 = arith.addf %85, %86 : vector<1x32xf32>
    %c0_51 = arith.constant 0 : index
    %c0_52 = arith.constant 0 : index
    %88 = vector.load %arg6[%c0_51, %c0_52] : memref<32x32xf32, #tpu.memory_space<vmem>>, vector<32x32xf32>
    %cst_53 = arith.constant dense<0.000000e+00> : vector<1x32xf32>
    %89 = tpu.matmul %81, %88, %cst_53 {dimension_numbers = #tpu.dot_dimension_numbers<[1], [0], [0], [1], [0, 0, 1, 1], [], []>} : vector<1x32xf32>, vector<32x32xf32>, vector<1x32xf32> -> vector<1x32xf32>
    %c0_54 = arith.constant 0 : index
    %c0_55 = arith.constant 0 : index
    %90 = vector.load %arg9[%c0_54, %c0_55] : memref<1x32xf32, #tpu.memory_space<vmem>>, vector<1x32xf32>
    %91 = arith.addf %89, %90 : vector<1x32xf32>
    %c0_56 = arith.constant 0 : index
    %c0_57 = arith.constant 0 : index
    %92 = vector.load %arg7[%c0_56, %c0_57] : memref<32x32xf32, #tpu.memory_space<vmem>>, vector<32x32xf32>
    %cst_58 = arith.constant dense<0.000000e+00> : vector<1x32xf32>
    %93 = tpu.matmul %81, %92, %cst_58 {dimension_numbers = #tpu.dot_dimension_numbers<[1], [0], [0], [1], [0, 0, 1, 1], [], []>} : vector<1x32xf32>, vector<32x32xf32>, vector<1x32xf32> -> vector<1x32xf32>
    %c0_59 = arith.constant 0 : index
    %c0_60 = arith.constant 0 : index
    %94 = vector.load %arg10[%c0_59, %c0_60] : memref<1x32xf32, #tpu.memory_space<vmem>>, vector<1x32xf32>
    %95 = arith.addf %93, %94 : vector<1x32xf32>
    %96 = arith.index_cast %c2_i32 : i32 to index
    %c0_61 = arith.constant 0 : index
    %97 = vector.load %arg1[%96, %c0_61] : memref<8x32xf32, #tpu.memory_space<vmem>>, vector<1x32xf32>
    %98 = arith.addf %97, %87 : vector<1x32xf32>
    %99 = arith.negf %98 : vector<1x32xf32>
    %100 = math.exp %99 : vector<1x32xf32>
    %cst_62 = arith.constant 1.000000e+00 : f32
    %101 = vector.broadcast %cst_62 : f32 to vector<1x32xf32>
    %102 = arith.addf %101, %100 : vector<1x32xf32>
    %103 = arith.divf %101, %102 : vector<1x32xf32>
    %104 = arith.index_cast %c2_i32 : i32 to index
    %c0_63 = arith.constant 0 : index
    %105 = vector.load %arg2[%104, %c0_63] : memref<8x32xf32, #tpu.memory_space<vmem>>, vector<1x32xf32>
    %106 = arith.addf %105, %91 : vector<1x32xf32>
    %107 = arith.negf %106 : vector<1x32xf32>
    %108 = math.exp %107 : vector<1x32xf32>
    %cst_64 = arith.constant 1.000000e+00 : f32
    %109 = vector.broadcast %cst_64 : f32 to vector<1x32xf32>
    %110 = arith.addf %109, %108 : vector<1x32xf32>
    %111 = arith.divf %109, %110 : vector<1x32xf32>
    %112 = arith.index_cast %c2_i32 : i32 to index
    %c0_65 = arith.constant 0 : index
    %113 = vector.load %arg3[%112, %c0_65] : memref<8x32xf32, #tpu.memory_space<vmem>>, vector<1x32xf32>
    %114 = arith.mulf %103, %95 : vector<1x32xf32>
    %115 = arith.addf %113, %114 : vector<1x32xf32>
    %116 = math.tanh %115 : vector<1x32xf32>
    %cst_66 = arith.constant 1.000000e+00 : f32
    %117 = vector.broadcast %cst_66 : f32 to vector<1x32xf32>
    %118 = arith.subf %117, %111 : vector<1x32xf32>
    %119 = arith.mulf %118, %116 : vector<1x32xf32>
    %120 = arith.mulf %111, %81 : vector<1x32xf32>
    %121 = arith.addf %119, %120 : vector<1x32xf32>
    %122 = arith.index_cast %c2_i32 : i32 to index
    %c0_67 = arith.constant 0 : index
    %123 = vector.load %arg11[%122, %c0_67] : memref<8x32xf32, #tpu.memory_space<vmem>>, vector<1x32xf32>
    tpu.vector_store %arg11[%122, %c0_67], %121 {strides = array<i32>} : memref<8x32xf32, #tpu.memory_space<vmem>>, vector<1x32xf32>,
    %c3_i32 = arith.constant 3 : i32
    %c0_68 = arith.constant 0 : index
    %c0_69 = arith.constant 0 : index
    %124 = vector.load %arg5[%c0_68, %c0_69] : memref<32x32xf32, #tpu.memory_space<vmem>>, vector<32x32xf32>
    %cst_70 = arith.constant dense<0.000000e+00> : vector<1x32xf32>
    %125 = tpu.matmul %121, %124, %cst_70 {dimension_numbers = #tpu.dot_dimension_numbers<[1], [0], [0], [1], [0, 0, 1, 1], [], []>} : vector<1x32xf32>, vector<32x32xf32>, vector<1x32xf32> -> vector<1x32xf32>
    %c0_71 = arith.constant 0 : index
    %c0_72 = arith.constant 0 : index
    %126 = vector.load %arg8[%c0_71, %c0_72] : memref<1x32xf32, #tpu.memory_space<vmem>>, vector<1x32xf32>
    %127 = arith.addf %125, %126 : vector<1x32xf32>
    %c0_73 = arith.constant 0 : index
    %c0_74 = arith.constant 0 : index
    %128 = vector.load %arg6[%c0_73, %c0_74] : memref<32x32xf32, #tpu.memory_space<vmem>>, vector<32x32xf32>
    %cst_75 = arith.constant dense<0.000000e+00> : vector<1x32xf32>
    %129 = tpu.matmul %121, %128, %cst_75 {dimension_numbers = #tpu.dot_dimension_numbers<[1], [0], [0], [1], [0, 0, 1, 1], [], []>} : vector<1x32xf32>, vector<32x32xf32>, vector<1x32xf32> -> vector<1x32xf32>
    %c0_76 = arith.constant 0 : index
    %c0_77 = arith.constant 0 : index
    %130 = vector.load %arg9[%c0_76, %c0_77] : memref<1x32xf32, #tpu.memory_space<vmem>>, vector<1x32xf32>
    %131 = arith.addf %129, %130 : vector<1x32xf32>
    %c0_78 = arith.constant 0 : index
    %c0_79 = arith.constant 0 : index
    %132 = vector.load %arg7[%c0_78, %c0_79] : memref<32x32xf32, #tpu.memory_space<vmem>>, vector<32x32xf32>
    %cst_80 = arith.constant dense<0.000000e+00> : vector<1x32xf32>
    %133 = tpu.matmul %121, %132, %cst_80 {dimension_numbers = #tpu.dot_dimension_numbers<[1], [0], [0], [1], [0, 0, 1, 1], [], []>} : vector<1x32xf32>, vector<32x32xf32>, vector<1x32xf32> -> vector<1x32xf32>
    %c0_81 = arith.constant 0 : index
    %c0_82 = arith.constant 0 : index
    %134 = vector.load %arg10[%c0_81, %c0_82] : memref<1x32xf32, #tpu.memory_space<vmem>>, vector<1x32xf32>
    %135 = arith.addf %133, %134 : vector<1x32xf32>
    %136 = arith.index_cast %c3_i32 : i32 to index
    %c0_83 = arith.constant 0 : index
    %137 = vector.load %arg1[%136, %c0_83] : memref<8x32xf32, #tpu.memory_space<vmem>>, vector<1x32xf32>
    %138 = arith.addf %137, %127 : vector<1x32xf32>
    %139 = arith.negf %138 : vector<1x32xf32>
    %140 = math.exp %139 : vector<1x32xf32>
    %cst_84 = arith.constant 1.000000e+00 : f32
    %141 = vector.broadcast %cst_84 : f32 to vector<1x32xf32>
    %142 = arith.addf %141, %140 : vector<1x32xf32>
    %143 = arith.divf %141, %142 : vector<1x32xf32>
    %144 = arith.index_cast %c3_i32 : i32 to index
    %c0_85 = arith.constant 0 : index
    %145 = vector.load %arg2[%144, %c0_85] : memref<8x32xf32, #tpu.memory_space<vmem>>, vector<1x32xf32>
    %146 = arith.addf %145, %131 : vector<1x32xf32>
    %147 = arith.negf %146 : vector<1x32xf32>
    %148 = math.exp %147 : vector<1x32xf32>
    %cst_86 = arith.constant 1.000000e+00 : f32
    %149 = vector.broadcast %cst_86 : f32 to vector<1x32xf32>
    %150 = arith.addf %149, %148 : vector<1x32xf32>
    %151 = arith.divf %149, %150 : vector<1x32xf32>
    %152 = arith.index_cast %c3_i32 : i32 to index
    %c0_87 = arith.constant 0 : index
    %153 = vector.load %arg3[%152, %c0_87] : memref<8x32xf32, #tpu.memory_space<vmem>>, vector<1x32xf32>
    %154 = arith.mulf %143, %135 : vector<1x32xf32>
    %155 = arith.addf %153, %154 : vector<1x32xf32>
    %156 = math.tanh %155 : vector<1x32xf32>
    %cst_88 = arith.constant 1.000000e+00 : f32
    %157 = vector.broadcast %cst_88 : f32 to vector<1x32xf32>
    %158 = arith.subf %157, %151 : vector<1x32xf32>
    %159 = arith.mulf %158, %156 : vector<1x32xf32>
    %160 = arith.mulf %151, %121 : vector<1x32xf32>
    %161 = arith.addf %159, %160 : vector<1x32xf32>
    %162 = arith.index_cast %c3_i32 : i32 to index
    %c0_89 = arith.constant 0 : index
    %163 = vector.load %arg11[%162, %c0_89] : memref<8x32xf32, #tpu.memory_space<vmem>>, vector<1x32xf32>
    tpu.vector_store %arg11[%162, %c0_89], %161 {strides = array<i32>} : memref<8x32xf32, #tpu.memory_space<vmem>>, vector<1x32xf32>,
    %c4_i32 = arith.constant 4 : i32
    %c0_90 = arith.constant 0 : index
    %c0_91 = arith.constant 0 : index
    %164 = vector.load %arg5[%c0_90, %c0_91] : memref<32x32xf32, #tpu.memory_space<vmem>>, vector<32x32xf32>
    %cst_92 = arith.constant dense<0.000000e+00> : vector<1x32xf32>
    %165 = tpu.matmul %161, %164, %cst_92 {dimension_numbers = #tpu.dot_dimension_numbers<[1], [0], [0], [1], [0, 0, 1, 1], [], []>} : vector<1x32xf32>, vector<32x32xf32>, vector<1x32xf32> -> vector<1x32xf32>
    %c0_93 = arith.constant 0 : index
    %c0_94 = arith.constant 0 : index
    %166 = vector.load %arg8[%c0_93, %c0_94] : memref<1x32xf32, #tpu.memory_space<vmem>>, vector<1x32xf32>
    %167 = arith.addf %165, %166 : vector<1x32xf32>
    %c0_95 = arith.constant 0 : index
    %c0_96 = arith.constant 0 : index
    %168 = vector.load %arg6[%c0_95, %c0_96] : memref<32x32xf32, #tpu.memory_space<vmem>>, vector<32x32xf32>
    %cst_97 = arith.constant dense<0.000000e+00> : vector<1x32xf32>
    %169 = tpu.matmul %161, %168, %cst_97 {dimension_numbers = #tpu.dot_dimension_numbers<[1], [0], [0], [1], [0, 0, 1, 1], [], []>} : vector<1x32xf32>, vector<32x32xf32>, vector<1x32xf32> -> vector<1x32xf32>
    %c0_98 = arith.constant 0 : index
    %c0_99 = arith.constant 0 : index
    %170 = vector.load %arg9[%c0_98, %c0_99] : memref<1x32xf32, #tpu.memory_space<vmem>>, vector<1x32xf32>
    %171 = arith.addf %169, %170 : vector<1x32xf32>
    %c0_100 = arith.constant 0 : index
    %c0_101 = arith.constant 0 : index
    %172 = vector.load %arg7[%c0_100, %c0_101] : memref<32x32xf32, #tpu.memory_space<vmem>>, vector<32x32xf32>
    %cst_102 = arith.constant dense<0.000000e+00> : vector<1x32xf32>
    %173 = tpu.matmul %161, %172, %cst_102 {dimension_numbers = #tpu.dot_dimension_numbers<[1], [0], [0], [1], [0, 0, 1, 1], [], []>} : vector<1x32xf32>, vector<32x32xf32>, vector<1x32xf32> -> vector<1x32xf32>
    %c0_103 = arith.constant 0 : index
    %c0_104 = arith.constant 0 : index
    %174 = vector.load %arg10[%c0_103, %c0_104] : memref<1x32xf32, #tpu.memory_space<vmem>>, vector<1x32xf32>
    %175 = arith.addf %173, %174 : vector<1x32xf32>
    %176 = arith.index_cast %c4_i32 : i32 to index
    %c0_105 = arith.constant 0 : index
    %177 = vector.load %arg1[%176, %c0_105] : memref<8x32xf32, #tpu.memory_space<vmem>>, vector<1x32xf32>
    %178 = arith.addf %177, %167 : vector<1x32xf32>
    %179 = arith.negf %178 : vector<1x32xf32>
    %180 = math.exp %179 : vector<1x32xf32>
    %cst_106 = arith.constant 1.000000e+00 : f32
    %181 = vector.broadcast %cst_106 : f32 to vector<1x32xf32>
    %182 = arith.addf %181, %180 : vector<1x32xf32>
    %183 = arith.divf %181, %182 : vector<1x32xf32>
    %184 = arith.index_cast %c4_i32 : i32 to index
    %c0_107 = arith.constant 0 : index
    %185 = vector.load %arg2[%184, %c0_107] : memref<8x32xf32, #tpu.memory_space<vmem>>, vector<1x32xf32>
    %186 = arith.addf %185, %171 : vector<1x32xf32>
    %187 = arith.negf %186 : vector<1x32xf32>
    %188 = math.exp %187 : vector<1x32xf32>
    %cst_108 = arith.constant 1.000000e+00 : f32
    %189 = vector.broadcast %cst_108 : f32 to vector<1x32xf32>
    %190 = arith.addf %189, %188 : vector<1x32xf32>
    %191 = arith.divf %189, %190 : vector<1x32xf32>
    %192 = arith.index_cast %c4_i32 : i32 to index
    %c0_109 = arith.constant 0 : index
    %193 = vector.load %arg3[%192, %c0_109] : memref<8x32xf32, #tpu.memory_space<vmem>>, vector<1x32xf32>
    %194 = arith.mulf %183, %175 : vector<1x32xf32>
    %195 = arith.addf %193, %194 : vector<1x32xf32>
    %196 = math.tanh %195 : vector<1x32xf32>
    %cst_110 = arith.constant 1.000000e+00 : f32
    %197 = vector.broadcast %cst_110 : f32 to vector<1x32xf32>
    %198 = arith.subf %197, %191 : vector<1x32xf32>
    %199 = arith.mulf %198, %196 : vector<1x32xf32>
    %200 = arith.mulf %191, %161 : vector<1x32xf32>
    %201 = arith.addf %199, %200 : vector<1x32xf32>
    %202 = arith.index_cast %c4_i32 : i32 to index
    %c0_111 = arith.constant 0 : index
    %203 = vector.load %arg11[%202, %c0_111] : memref<8x32xf32, #tpu.memory_space<vmem>>, vector<1x32xf32>
    tpu.vector_store %arg11[%202, %c0_111], %201 {strides = array<i32>} : memref<8x32xf32, #tpu.memory_space<vmem>>, vector<1x32xf32>,
    %c5_i32 = arith.constant 5 : i32
    %c0_112 = arith.constant 0 : index
    %c0_113 = arith.constant 0 : index
    %204 = vector.load %arg5[%c0_112, %c0_113] : memref<32x32xf32, #tpu.memory_space<vmem>>, vector<32x32xf32>
    %cst_114 = arith.constant dense<0.000000e+00> : vector<1x32xf32>
    %205 = tpu.matmul %201, %204, %cst_114 {dimension_numbers = #tpu.dot_dimension_numbers<[1], [0], [0], [1], [0, 0, 1, 1], [], []>} : vector<1x32xf32>, vector<32x32xf32>, vector<1x32xf32> -> vector<1x32xf32>
    %c0_115 = arith.constant 0 : index
    %c0_116 = arith.constant 0 : index
    %206 = vector.load %arg8[%c0_115, %c0_116] : memref<1x32xf32, #tpu.memory_space<vmem>>, vector<1x32xf32>
    %207 = arith.addf %205, %206 : vector<1x32xf32>
    %c0_117 = arith.constant 0 : index
    %c0_118 = arith.constant 0 : index
    %208 = vector.load %arg6[%c0_117, %c0_118] : memref<32x32xf32, #tpu.memory_space<vmem>>, vector<32x32xf32>
    %cst_119 = arith.constant dense<0.000000e+00> : vector<1x32xf32>
    %209 = tpu.matmul %201, %208, %cst_119 {dimension_numbers = #tpu.dot_dimension_numbers<[1], [0], [0], [1], [0, 0, 1, 1], [], []>} : vector<1x32xf32>, vector<32x32xf32>, vector<1x32xf32> -> vector<1x32xf32>
    %c0_120 = arith.constant 0 : index
    %c0_121 = arith.constant 0 : index
    %210 = vector.load %arg9[%c0_120, %c0_121] : memref<1x32xf32, #tpu.memory_space<vmem>>, vector<1x32xf32>
    %211 = arith.addf %209, %210 : vector<1x32xf32>
    %c0_122 = arith.constant 0 : index
    %c0_123 = arith.constant 0 : index
    %212 = vector.load %arg7[%c0_122, %c0_123] : memref<32x32xf32, #tpu.memory_space<vmem>>, vector<32x32xf32>
    %cst_124 = arith.constant dense<0.000000e+00> : vector<1x32xf32>
    %213 = tpu.matmul %201, %212, %cst_124 {dimension_numbers = #tpu.dot_dimension_numbers<[1], [0], [0], [1], [0, 0, 1, 1], [], []>} : vector<1x32xf32>, vector<32x32xf32>, vector<1x32xf32> -> vector<1x32xf32>
    %c0_125 = arith.constant 0 : index
    %c0_126 = arith.constant 0 : index
    %214 = vector.load %arg10[%c0_125, %c0_126] : memref<1x32xf32, #tpu.memory_space<vmem>>, vector<1x32xf32>
    %215 = arith.addf %213, %214 : vector<1x32xf32>
    %216 = arith.index_cast %c5_i32 : i32 to index
    %c0_127 = arith.constant 0 : index
    %217 = vector.load %arg1[%216, %c0_127] : memref<8x32xf32, #tpu.memory_space<vmem>>, vector<1x32xf32>
    %218 = arith.addf %217, %207 : vector<1x32xf32>
    %219 = arith.negf %218 : vector<1x32xf32>
    %220 = math.exp %219 : vector<1x32xf32>
    %cst_128 = arith.constant 1.000000e+00 : f32
    %221 = vector.broadcast %cst_128 : f32 to vector<1x32xf32>
    %222 = arith.addf %221, %220 : vector<1x32xf32>
    %223 = arith.divf %221, %222 : vector<1x32xf32>
    %224 = arith.index_cast %c5_i32 : i32 to index
    %c0_129 = arith.constant 0 : index
    %225 = vector.load %arg2[%224, %c0_129] : memref<8x32xf32, #tpu.memory_space<vmem>>, vector<1x32xf32>
    %226 = arith.addf %225, %211 : vector<1x32xf32>
    %227 = arith.negf %226 : vector<1x32xf32>
    %228 = math.exp %227 : vector<1x32xf32>
    %cst_130 = arith.constant 1.000000e+00 : f32
    %229 = vector.broadcast %cst_130 : f32 to vector<1x32xf32>
    %230 = arith.addf %229, %228 : vector<1x32xf32>
    %231 = arith.divf %229, %230 : vector<1x32xf32>
    %232 = arith.index_cast %c5_i32 : i32 to index
    %c0_131 = arith.constant 0 : index
    %233 = vector.load %arg3[%232, %c0_131] : memref<8x32xf32, #tpu.memory_space<vmem>>, vector<1x32xf32>
    %234 = arith.mulf %223, %215 : vector<1x32xf32>
    %235 = arith.addf %233, %234 : vector<1x32xf32>
    %236 = math.tanh %235 : vector<1x32xf32>
    %cst_132 = arith.constant 1.000000e+00 : f32
    %237 = vector.broadcast %cst_132 : f32 to vector<1x32xf32>
    %238 = arith.subf %237, %231 : vector<1x32xf32>
    %239 = arith.mulf %238, %236 : vector<1x32xf32>
    %240 = arith.mulf %231, %201 : vector<1x32xf32>
    %241 = arith.addf %239, %240 : vector<1x32xf32>
    %242 = arith.index_cast %c5_i32 : i32 to index
    %c0_133 = arith.constant 0 : index
    %243 = vector.load %arg11[%242, %c0_133] : memref<8x32xf32, #tpu.memory_space<vmem>>, vector<1x32xf32>
    tpu.vector_store %arg11[%242, %c0_133], %241 {strides = array<i32>} : memref<8x32xf32, #tpu.memory_space<vmem>>, vector<1x32xf32>,
    %c6_i32 = arith.constant 6 : i32
    %c0_134 = arith.constant 0 : index
    %c0_135 = arith.constant 0 : index
    %244 = vector.load %arg5[%c0_134, %c0_135] : memref<32x32xf32, #tpu.memory_space<vmem>>, vector<32x32xf32>
    %cst_136 = arith.constant dense<0.000000e+00> : vector<1x32xf32>
    %245 = tpu.matmul %241, %244, %cst_136 {dimension_numbers = #tpu.dot_dimension_numbers<[1], [0], [0], [1], [0, 0, 1, 1], [], []>} : vector<1x32xf32>, vector<32x32xf32>, vector<1x32xf32> -> vector<1x32xf32>
    %c0_137 = arith.constant 0 : index
    %c0_138 = arith.constant 0 : index
    %246 = vector.load %arg8[%c0_137, %c0_138] : memref<1x32xf32, #tpu.memory_space<vmem>>, vector<1x32xf32>
    %247 = arith.addf %245, %246 : vector<1x32xf32>
    %c0_139 = arith.constant 0 : index
    %c0_140 = arith.constant 0 : index
    %248 = vector.load %arg6[%c0_139, %c0_140] : memref<32x32xf32, #tpu.memory_space<vmem>>, vector<32x32xf32>
    %cst_141 = arith.constant dense<0.000000e+00> : vector<1x32xf32>
    %249 = tpu.matmul %241, %248, %cst_141 {dimension_numbers = #tpu.dot_dimension_numbers<[1], [0], [0], [1], [0, 0, 1, 1], [], []>} : vector<1x32xf32>, vector<32x32xf32>, vector<1x32xf32> -> vector<1x32xf32>
    %c0_142 = arith.constant 0 : index
    %c0_143 = arith.constant 0 : index
    %250 = vector.load %arg9[%c0_142, %c0_143] : memref<1x32xf32, #tpu.memory_space<vmem>>, vector<1x32xf32>
    %251 = arith.addf %249, %250 : vector<1x32xf32>
    %c0_144 = arith.constant 0 : index
    %c0_145 = arith.constant 0 : index
    %252 = vector.load %arg7[%c0_144, %c0_145] : memref<32x32xf32, #tpu.memory_space<vmem>>, vector<32x32xf32>
    %cst_146 = arith.constant dense<0.000000e+00> : vector<1x32xf32>
    %253 = tpu.matmul %241, %252, %cst_146 {dimension_numbers = #tpu.dot_dimension_numbers<[1], [0], [0], [1], [0, 0, 1, 1], [], []>} : vector<1x32xf32>, vector<32x32xf32>, vector<1x32xf32> -> vector<1x32xf32>
    %c0_147 = arith.constant 0 : index
    %c0_148 = arith.constant 0 : index
    %254 = vector.load %arg10[%c0_147, %c0_148] : memref<1x32xf32, #tpu.memory_space<vmem>>, vector<1x32xf32>
    %255 = arith.addf %253, %254 : vector<1x32xf32>
    %256 = arith.index_cast %c6_i32 : i32 to index
    %c0_149 = arith.constant 0 : index
    %257 = vector.load %arg1[%256, %c0_149] : memref<8x32xf32, #tpu.memory_space<vmem>>, vector<1x32xf32>
    %258 = arith.addf %257, %247 : vector<1x32xf32>
    %259 = arith.negf %258 : vector<1x32xf32>
    %260 = math.exp %259 : vector<1x32xf32>
    %cst_150 = arith.constant 1.000000e+00 : f32
    %261 = vector.broadcast %cst_150 : f32 to vector<1x32xf32>
    %262 = arith.addf %261, %260 : vector<1x32xf32>
    %263 = arith.divf %261, %262 : vector<1x32xf32>
    %264 = arith.index_cast %c6_i32 : i32 to index
    %c0_151 = arith.constant 0 : index
    %265 = vector.load %arg2[%264, %c0_151] : memref<8x32xf32, #tpu.memory_space<vmem>>, vector<1x32xf32>
    %266 = arith.addf %265, %251 : vector<1x32xf32>
    %267 = arith.negf %266 : vector<1x32xf32>
    %268 = math.exp %267 : vector<1x32xf32>
    %cst_152 = arith.constant 1.000000e+00 : f32
    %269 = vector.broadcast %cst_152 : f32 to vector<1x32xf32>
    %270 = arith.addf %269, %268 : vector<1x32xf32>
    %271 = arith.divf %269, %270 : vector<1x32xf32>
    %272 = arith.index_cast %c6_i32 : i32 to index
    %c0_153 = arith.constant 0 : index
    %273 = vector.load %arg3[%272, %c0_153] : memref<8x32xf32, #tpu.memory_space<vmem>>, vector<1x32xf32>
    %274 = arith.mulf %263, %255 : vector<1x32xf32>
    %275 = arith.addf %273, %274 : vector<1x32xf32>
    %276 = math.tanh %275 : vector<1x32xf32>
    %cst_154 = arith.constant 1.000000e+00 : f32
    %277 = vector.broadcast %cst_154 : f32 to vector<1x32xf32>
    %278 = arith.subf %277, %271 : vector<1x32xf32>
    %279 = arith.mulf %278, %276 : vector<1x32xf32>
    %280 = arith.mulf %271, %241 : vector<1x32xf32>
    %281 = arith.addf %279, %280 : vector<1x32xf32>
    %282 = arith.index_cast %c6_i32 : i32 to index
    %c0_155 = arith.constant 0 : index
    %283 = vector.load %arg11[%282, %c0_155] : memref<8x32xf32, #tpu.memory_space<vmem>>, vector<1x32xf32>
    tpu.vector_store %arg11[%282, %c0_155], %281 {strides = array<i32>} : memref<8x32xf32, #tpu.memory_space<vmem>>, vector<1x32xf32>,
    %c7_i32 = arith.constant 7 : i32
    %c0_156 = arith.constant 0 : index
    %c0_157 = arith.constant 0 : index
    %284 = vector.load %arg5[%c0_156, %c0_157] : memref<32x32xf32, #tpu.memory_space<vmem>>, vector<32x32xf32>
    %cst_158 = arith.constant dense<0.000000e+00> : vector<1x32xf32>
    %285 = tpu.matmul %281, %284, %cst_158 {dimension_numbers = #tpu.dot_dimension_numbers<[1], [0], [0], [1], [0, 0, 1, 1], [], []>} : vector<1x32xf32>, vector<32x32xf32>, vector<1x32xf32> -> vector<1x32xf32>
    %c0_159 = arith.constant 0 : index
    %c0_160 = arith.constant 0 : index
    %286 = vector.load %arg8[%c0_159, %c0_160] : memref<1x32xf32, #tpu.memory_space<vmem>>, vector<1x32xf32>
    %287 = arith.addf %285, %286 : vector<1x32xf32>
    %c0_161 = arith.constant 0 : index
    %c0_162 = arith.constant 0 : index
    %288 = vector.load %arg6[%c0_161, %c0_162] : memref<32x32xf32, #tpu.memory_space<vmem>>, vector<32x32xf32>
    %cst_163 = arith.constant dense<0.000000e+00> : vector<1x32xf32>
    %289 = tpu.matmul %281, %288, %cst_163 {dimension_numbers = #tpu.dot_dimension_numbers<[1], [0], [0], [1], [0, 0, 1, 1], [], []>} : vector<1x32xf32>, vector<32x32xf32>, vector<1x32xf32> -> vector<1x32xf32>
    %c0_164 = arith.constant 0 : index
    %c0_165 = arith.constant 0 : index
    %290 = vector.load %arg9[%c0_164, %c0_165] : memref<1x32xf32, #tpu.memory_space<vmem>>, vector<1x32xf32>
    %291 = arith.addf %289, %290 : vector<1x32xf32>
    %c0_166 = arith.constant 0 : index
    %c0_167 = arith.constant 0 : index
    %292 = vector.load %arg7[%c0_166, %c0_167] : memref<32x32xf32, #tpu.memory_space<vmem>>, vector<32x32xf32>
    %cst_168 = arith.constant dense<0.000000e+00> : vector<1x32xf32>
    %293 = tpu.matmul %281, %292, %cst_168 {dimension_numbers = #tpu.dot_dimension_numbers<[1], [0], [0], [1], [0, 0, 1, 1], [], []>} : vector<1x32xf32>, vector<32x32xf32>, vector<1x32xf32> -> vector<1x32xf32>
    %c0_169 = arith.constant 0 : index
    %c0_170 = arith.constant 0 : index
    %294 = vector.load %arg10[%c0_169, %c0_170] : memref<1x32xf32, #tpu.memory_space<vmem>>, vector<1x32xf32>
    %295 = arith.addf %293, %294 : vector<1x32xf32>
    %296 = arith.index_cast %c7_i32 : i32 to index
    %c0_171 = arith.constant 0 : index
    %297 = vector.load %arg1[%296, %c0_171] : memref<8x32xf32, #tpu.memory_space<vmem>>, vector<1x32xf32>
    %298 = arith.addf %297, %287 : vector<1x32xf32>
    %299 = arith.negf %298 : vector<1x32xf32>
    %300 = math.exp %299 : vector<1x32xf32>
    %cst_172 = arith.constant 1.000000e+00 : f32
    %301 = vector.broadcast %cst_172 : f32 to vector<1x32xf32>
    %302 = arith.addf %301, %300 : vector<1x32xf32>
    %303 = arith.divf %301, %302 : vector<1x32xf32>
    %304 = arith.index_cast %c7_i32 : i32 to index
    %c0_173 = arith.constant 0 : index
    %305 = vector.load %arg2[%304, %c0_173] : memref<8x32xf32, #tpu.memory_space<vmem>>, vector<1x32xf32>
    %306 = arith.addf %305, %291 : vector<1x32xf32>
    %307 = arith.negf %306 : vector<1x32xf32>
    %308 = math.exp %307 : vector<1x32xf32>
    %cst_174 = arith.constant 1.000000e+00 : f32
    %309 = vector.broadcast %cst_174 : f32 to vector<1x32xf32>
    %310 = arith.addf %309, %308 : vector<1x32xf32>
    %311 = arith.divf %309, %310 : vector<1x32xf32>
    %312 = arith.index_cast %c7_i32 : i32 to index
    %c0_175 = arith.constant 0 : index
    %313 = vector.load %arg3[%312, %c0_175] : memref<8x32xf32, #tpu.memory_space<vmem>>, vector<1x32xf32>
    %314 = arith.mulf %303, %295 : vector<1x32xf32>
    %315 = arith.addf %313, %314 : vector<1x32xf32>
    %316 = math.tanh %315 : vector<1x32xf32>
    %cst_176 = arith.constant 1.000000e+00 : f32
    %317 = vector.broadcast %cst_176 : f32 to vector<1x32xf32>
    %318 = arith.subf %317, %311 : vector<1x32xf32>
    %319 = arith.mulf %318, %316 : vector<1x32xf32>
    %320 = arith.mulf %311, %281 : vector<1x32xf32>
    %321 = arith.addf %319, %320 : vector<1x32xf32>
    %322 = arith.index_cast %c7_i32 : i32 to index
    %c0_177 = arith.constant 0 : index
    %323 = vector.load %arg11[%322, %c0_177] : memref<8x32xf32, #tpu.memory_space<vmem>>, vector<1x32xf32>
    tpu.vector_store %arg11[%322, %c0_177], %321 {strides = array<i32>} : memref<8x32xf32, #tpu.memory_space<vmem>>, vector<1x32xf32>,
    %c8_i32 = arith.constant 8 : i32
    %c0_178 = arith.constant 0 : index
    %c0_179 = arith.constant 0 : index
    %324 = vector.load %arg12[%c0_178, %c0_179] : memref<1x32xf32, #tpu.memory_space<vmem>>, vector<1x32xf32>
    tpu.vector_store %arg12[%c0_178, %c0_179], %321 {strides = array<i32>} : memref<1x32xf32, #tpu.memory_space<vmem>>, vector<1x32xf32>,
    return
  }
  func.func @transform_0(%arg0: i32) -> (i32, i32) {
    %c0_i32 = arith.constant 0 : i32
    %c0_i32_0 = arith.constant 0 : i32
    return %arg0, %c0_i32 : i32, i32
  }
  func.func @transform_1(%arg0: i32) -> (i32, i32) {
    %c0_i32 = arith.constant 0 : i32
    %c0_i32_0 = arith.constant 0 : i32
    return %arg0, %c0_i32 : i32, i32
  }
  func.func @transform_2(%arg0: i32) -> (i32, i32) {
    %c0_i32 = arith.constant 0 : i32
    %c0_i32_0 = arith.constant 0 : i32
    return %arg0, %c0_i32 : i32, i32
  }
  func.func @transform_3(%arg0: i32) -> (i32, i32) {
    %c0_i32 = arith.constant 0 : i32
    %c0_i32_0 = arith.constant 0 : i32
    %c0_i32_1 = arith.constant 0 : i32
    return %c0_i32, %c0_i32_0 : i32, i32
  }
  func.func @transform_4(%arg0: i32) -> (i32, i32) {
    %c0_i32 = arith.constant 0 : i32
    %c0_i32_0 = arith.constant 0 : i32
    %c0_i32_1 = arith.constant 0 : i32
    return %c0_i32, %c0_i32_0 : i32, i32
  }
  func.func @transform_5(%arg0: i32) -> (i32, i32) {
    %c0_i32 = arith.constant 0 : i32
    %c0_i32_0 = arith.constant 0 : i32
    %c0_i32_1 = arith.constant 0 : i32
    return %c0_i32, %c0_i32_0 : i32, i32
  }
  func.func @transform_6(%arg0: i32) -> (i32, i32) {
    %c0_i32 = arith.constant 0 : i32
    %c0_i32_0 = arith.constant 0 : i32
    %c0_i32_1 = arith.constant 0 : i32
    return %c0_i32, %c0_i32_0 : i32, i32
  }
  func.func @transform_7(%arg0: i32) -> (i32, i32) {
    %c0_i32 = arith.constant 0 : i32
    %c0_i32_0 = arith.constant 0 : i32
    %c0_i32_1 = arith.constant 0 : i32
    return %c0_i32, %c0_i32_0 : i32, i32
  }
  func.func @transform_8(%arg0: i32) -> (i32, i32) {
    %c0_i32 = arith.constant 0 : i32
    %c0_i32_0 = arith.constant 0 : i32
    %c0_i32_1 = arith.constant 0 : i32
    return %c0_i32, %c0_i32_0 : i32, i32
  }
  func.func @transform_9(%arg0: i32) -> (i32, i32) {
    %c0_i32 = arith.constant 0 : i32
    %c0_i32_0 = arith.constant 0 : i32
    %c0_i32_1 = arith.constant 0 : i32
    return %c0_i32, %c0_i32_0 : i32, i32
  }
  func.func @transform_10(%arg0: i32) -> (i32, i32) {
    %c0_i32 = arith.constant 0 : i32
    %c0_i32_0 = arith.constant 0 : i32
    return %arg0, %c0_i32 : i32, i32
  }
}

</mosaic_0001>

<llo_original>
// kernel: encode_rnn_forward.1
$region0: #{encode_rnn_forward.1}
  #allocation0 [shape = 'u32[]', space=smem, size = 0x4, offset = 0x4, fixed_abs, tag = 'smem constant byte address 0x4 - core index']
  #allocation1 [shape = 'u32[144,128]{1,0:T(1,128)}', space=vmem, size = 0x12000, scoped, tag = 'internal scratch']
  #allocation2 [shape = 'f32[1,32]{1,0:T(1,128)}', space=vmem, size = 0x200, scoped, tag = 'scratch operand']
  %s0 = inlined_call_operand.vmem [shape: f32[8,32], index: 0, kind: input, shape index: {}]
  %s1 = inlined_call_operand.vmem [shape: f32[8,32], index: 1, kind: input, shape index: {}]
  %s2 = inlined_call_operand.vmem [shape: f32[8,32], index: 2, kind: input, shape index: {}]
  %s3 = inlined_call_operand.vmem [shape: f32[1,32], index: 3, kind: input, shape index: {}]
  %s4 = inlined_call_operand.vmem [shape: f32[32,32], index: 4, kind: input, shape index: {}]
  %s5 = inlined_call_operand.vmem [shape: f32[32,32], index: 5, kind: input, shape index: {}]
  %s6 = inlined_call_operand.vmem [shape: f32[32,32], index: 6, kind: input, shape index: {}]
  %s7 = inlined_call_operand.vmem [shape: f32[1,32], index: 7, kind: input, shape index: {}]
  %s8 = inlined_call_operand.vmem [shape: f32[1,32], index: 8, kind: input, shape index: {}]
  %s9 = inlined_call_operand.vmem [shape: f32[1,32], index: 9, kind: input, shape index: {}]
  %s10 = inlined_call_operand.vmem [shape: f32[8,32], index: 10, kind: output, shape index: {}]
  %s11 = sld [smem:[#allocation0]]
  $region54: #{encode_rnn_forward.1} parent=0
    _
  %s13 = ssub.s32 1, %s11
  %s14 = scalar_select 0, %s13, %s11
  // Predicated region
  $region2: #{encode_rnn_forward.1} parent=0 // pred_check
    _
  $region3: #{encode_rnn_forward.1} parent=0 // pred_check_branch
    %16 = sbr.rel (0) target = $region5
  $region4: #{encode_rnn_forward.1} parent=0 // pred_region
    _
  $region5: #{encode_rnn_forward.1} parent=0 // pred_fallthru
    _
  // Predicated region
  $region6: #{encode_rnn_forward.1} parent=0 // pred_check
    _
  $region7: #{encode_rnn_forward.1} parent=0 // pred_check_branch
    %18 = sbr.rel (0) target = $region9
  $region8: #{encode_rnn_forward.1} parent=0 // pred_region
    _
  $region9: #{encode_rnn_forward.1} parent=0 // pred_fallthru
    _
  // Predicated region
  $region10: #{encode_rnn_forward.1} parent=0 // pred_check
    _
  $region11: #{encode_rnn_forward.1} parent=0 // pred_check_branch
    %20 = sbr.rel (0) target = $region13
  $region12: #{encode_rnn_forward.1} parent=0 // pred_region
    _
  $region13: #{encode_rnn_forward.1} parent=0 // pred_fallthru
    _
  // Predicated region
  $region14: #{encode_rnn_forward.1} parent=0 // pred_check
    _
  $region15: #{encode_rnn_forward.1} parent=0 // pred_check_branch
    %22 = sbr.rel (0) target = $region17
  $region16: #{encode_rnn_forward.1} parent=0 // pred_region
    _
  $region17: #{encode_rnn_forward.1} parent=0 // pred_fallthru
    _
  // Predicated region
  $region18: #{encode_rnn_forward.1} parent=0 // pred_check
    _
  $region19: #{encode_rnn_forward.1} parent=0 // pred_check_branch
    %24 = sbr.rel (0) target = $region21
  $region20: #{encode_rnn_forward.1} parent=0 // pred_region
    _
  $region21: #{encode_rnn_forward.1} parent=0 // pred_fallthru
    _
  // Predicated region
  $region22: #{encode_rnn_forward.1} parent=0 // pred_check
    _
  $region23: #{encode_rnn_forward.1} parent=0 // pred_check_branch
    %26 = sbr.rel (0) target = $region25
  $region24: #{encode_rnn_forward.1} parent=0 // pred_region
    _
  $region25: #{encode_rnn_forward.1} parent=0 // pred_fallthru
    _
  // Predicated region
  $region26: #{encode_rnn_forward.1} parent=0 // pred_check
    _
  $region27: #{encode_rnn_forward.1} parent=0 // pred_check_branch
    %28 = sbr.rel (0) target = $region29
  $region28: #{encode_rnn_forward.1} parent=0 // pred_region
    _
  $region29: #{encode_rnn_forward.1} parent=0 // pred_fallthru
    _
  // Predicated region
  $region30: #{encode_rnn_forward.1} parent=0 // pred_check
    _
  $region31: #{encode_rnn_forward.1} parent=0 // pred_check_branch
    %30 = sbr.rel (0) target = $region33
  $region32: #{encode_rnn_forward.1} parent=0 // pred_region
    _
  $region33: #{encode_rnn_forward.1} parent=0 // pred_fallthru
    _
  // Predicated region
  $region34: #{encode_rnn_forward.1} parent=0 // pred_check
    _
  $region35: #{encode_rnn_forward.1} parent=0 // pred_check_branch
    %32 = sbr.rel (0) target = $region37
  $region36: #{encode_rnn_forward.1} parent=0 // pred_region
    _
  $region37: #{encode_rnn_forward.1} parent=0 // pred_fallthru
    _
  // Predicated region
  $region38: #{encode_rnn_forward.1} parent=0 // pred_check
    _
  $region39: #{encode_rnn_forward.1} parent=0 // pred_check_branch
    %34 = sbr.rel (0) target = $region41
  $region40: #{encode_rnn_forward.1} parent=0 // pred_region
    _
  $region41: #{encode_rnn_forward.1} parent=0 // pred_fallthru
    _
  %p35 = scmp.eq.s32.totalorder 0, 0
  // Predicated region
  $region42: #{encode_rnn_forward.1} parent=0 // pred_check
    %p36 = pneg %p35
  $region43: #{encode_rnn_forward.1} parent=0 // pred_check_branch
    %38 = sbr.rel (%p36) target = $region45
  $region44: #{encode_rnn_forward.1} parent=0 // pred_region
    %v39 = vld [vmem:[%s3] sm:$0x1]
    %vm40 = vcmask 253952
    %41 = vst.msk [vmem:[#allocation2] sm:$0x1] %vm40, %v39
  $region45: #{encode_rnn_forward.1} parent=0 // pred_fallthru
    _
  %v42 = vld [vmem:[#allocation2] sm:$0x1]
  %v43 = vld [vmem:[%s4] sm:$0xff]
  %v44 = vld [vmem:[%s4 + $0x8] sm:$0xff]
  %v45 = vld [vmem:[%s4 + $0x10] sm:$0xff]
  %v46 = vld [vmem:[%s4 + $0x18] sm:$0xff]
  %v47 = vld [vmem:[%s7] sm:$0x1]
  %vm48 = vcmask 261120
  %v50 = vsel %vm48, %v42, 0
  %52 = vmatprep.subr.mxu0 0.0
  %53 = vmatpush1.msra.mxu0 %v43
  %54 = vmatprep.subr.mxu0 0.0
  %55 = vmatpush1.msra.mxu0 %v44
  %56 = vmatprep.subr.mxu0 0.0
  %57 = vmatpush1.msra.mxu0 %v45
  %58 = vmatprep.subr.mxu0 0.0
  %59 = vmatpush1.msra.mxu0 %v46
  %60 = vmatprep.subr.mxu0 0.0
  %61 = vmatpush1.msra.mxu0 0.0
  %62 = vmatprep.subr.mxu0 0.0
  %63 = vmatpush1.msra.mxu0 0.0
  %64 = vmatprep.subr.mxu0 0.0
  %65 = vmatpush1.msra.mxu0 0.0
  %66 = vmatprep.subr.mxu0 0.0
  %67 = vmatpush1.msra.mxu0 0.0
  %68 = vmatprep.subr.mxu0 0.0
  %69 = vmatpush1.msra.mxu0 0.0
  %70 = vmatprep.subr.mxu0 0.0
  %71 = vmatpush1.msra.mxu0 0.0
  %72 = vmatprep.subr.mxu0 0.0
  %73 = vmatpush1.msra.mxu0 0.0
  %74 = vmatprep.subr.mxu0 0.0
  %75 = vmatpush1.msra.mxu0 0.0
  %76 = vmatprep.subr.mxu0 0.0
  %77 = vmatpush1.msra.mxu0 0.0
  %78 = vmatprep.subr.mxu0 0.0
  %79 = vmatpush1.msra.mxu0 0.0
  %80 = vmatprep.subr.mxu0 0.0
  %81 = vmatpush1.msra.mxu0 0.0
  %82 = vmatprep.subr.mxu0 0.0
  %83 = vmatpush1.msra.mxu0 0.0
  %84 = vmatprep.subr.mxu0 0.0
  %85 = vmatpush1.msra.mxu0 0.0
  %86 = vmatprep.subr.mxu0 0.0
  %87 = vmatpush1.msra.mxu0 0.0
  %88 = vmatprep.subr.mxu0 0.0
  %89 = vmatpush1.msra.mxu0 0.0
  %90 = vmatprep.subr.mxu0 0.0
  %91 = vmatpush1.msra.mxu0 0.0
  %92 = vmatprep.subr.mxu0 0.0
  %93 = vmatpush1.msra.mxu0 0.0
  %94 = vmatprep.subr.mxu0 0.0
  %95 = vmatpush1.msra.mxu0 0.0
  %96 = vmatprep.subr.mxu0 0.0
  %97 = vmatpush1.msra.mxu0 0.0
  %98 = vmatprep.subr.mxu0 0.0
  %99 = vmatpush1.msra.mxu0 0.0
  %100 = vmatprep.subr.mxu0 0.0
  %101 = vmatpush1.msra.mxu0 0.0
  %102 = vmatprep.subr.mxu0 0.0
  %103 = vmatpush1.msra.mxu0 0.0
  %104 = vmatprep.subr.mxu0 0.0
  %105 = vmatpush1.msra.mxu0 0.0
  %106 = vmatprep.subr.mxu0 0.0
  %107 = vmatpush1.msra.mxu0 0.0
  %108 = vmatprep.subr.mxu0 0.0
  %109 = vmatpush1.msra.mxu0 0.0
  %110 = vmatprep.subr.mxu0 0.0
  %111 = vmatpush1.msra.mxu0 0.0
  %112 = vmatprep.subr.mxu0 0.0
  %113 = vmatpush1.msra.mxu0 0.0
  %114 = vmatprep.subr.mxu0 0.0
  %115 = vmatpush1.msra.mxu0 0.0
  %116 = vmatprep.mubr.f32.mxu0 0.0
  %117 = vmatmul.mubr.f32.gmra.mrb[0].mxu0 %v50
  %v118 = vpop.f32.mrb[0].mxu0
  %v119 = vadd.f32 %v47, %v118
  %v120 = vpop.f32.mrb[0].mxu0
  %121 = vdwg.mxu0
  %v122 = vld [vmem:[%s5] sm:$0xff]
  %v123 = vld [vmem:[%s5 + $0x8] sm:$0xff]
  %v124 = vld [vmem:[%s5 + $0x10] sm:$0xff]
  %v125 = vld [vmem:[%s5 + $0x18] sm:$0xff]
  %v126 = vld [vmem:[%s8] sm:$0x1]
  %127 = vmatprep.subr.mxu0 0.0
  %128 = vmatpush1.msra.mxu0 %v122
  %129 = vmatprep.subr.mxu0 0.0
  %130 = vmatpush1.msra.mxu0 %v123
  %131 = vmatprep.subr.mxu0 0.0
  %132 = vmatpush1.msra.mxu0 %v124
  %133 = vmatprep.subr.mxu0 0.0
  %134 = vmatpush1.msra.mxu0 %v125
  %135 = vmatprep.subr.mxu0 0.0
  %136 = vmatpush1.msra.mxu0 0.0
  %137 = vmatprep.subr.mxu0 0.0
  %138 = vmatpush1.msra.mxu0 0.0
  %139 = vmatprep.subr.mxu0 0.0
  %140 = vmatpush1.msra.mxu0 0.0
  %141 = vmatprep.subr.mxu0 0.0
  %142 = vmatpush1.msra.mxu0 0.0
  %143 = vmatprep.subr.mxu0 0.0
  %144 = vmatpush1.msra.mxu0 0.0
  %145 = vmatprep.subr.mxu0 0.0
  %146 = vmatpush1.msra.mxu0 0.0
  %147 = vmatprep.subr.mxu0 0.0
  %148 = vmatpush1.msra.mxu0 0.0
  %149 = vmatprep.subr.mxu0 0.0
  %150 = vmatpush1.msra.mxu0 0.0
  %151 = vmatprep.subr.mxu0 0.0
  %152 = vmatpush1.msra.mxu0 0.0
  %153 = vmatprep.subr.mxu0 0.0
  %154 = vmatpush1.msra.mxu0 0.0
  %155 = vmatprep.subr.mxu0 0.0
  %156 = vmatpush1.msra.mxu0 0.0
  %157 = vmatprep.subr.mxu0 0.0
  %158 = vmatpush1.msra.mxu0 0.0
  %159 = vmatprep.subr.mxu0 0.0
  %160 = vmatpush1.msra.mxu0 0.0
  %161 = vmatprep.subr.mxu0 0.0
  %162 = vmatpush1.msra.mxu0 0.0
  %163 = vmatprep.subr.mxu0 0.0
  %164 = vmatpush1.msra.mxu0 0.0
  %165 = vmatprep.subr.mxu0 0.0
  %166 = vmatpush1.msra.mxu0 0.0
  %167 = vmatprep.subr.mxu0 0.0
  %168 = vmatpush1.msra.mxu0 0.0
  %169 = vmatprep.subr.mxu0 0.0
  %170 = vmatpush1.msra.mxu0 0.0
  %171 = vmatprep.subr.mxu0 0.0
  %172 = vmatpush1.msra.mxu0 0.0
  %173 = vmatprep.subr.mxu0 0.0
  %174 = vmatpush1.msra.mxu0 0.0
  %175 = vmatprep.subr.mxu0 0.0
  %176 = vmatpush1.msra.mxu0 0.0
  %177 = vmatprep.subr.mxu0 0.0
  %178 = vmatpush1.msra.mxu0 0.0
  %179 = vmatprep.subr.mxu0 0.0
  %180 = vmatpush1.msra.mxu0 0.0
  %181 = vmatprep.subr.mxu0 0.0
  %182 = vmatpush1.msra.mxu0 0.0
  %183 = vmatprep.subr.mxu0 0.0
  %184 = vmatpush1.msra.mxu0 0.0
  %185 = vmatprep.subr.mxu0 0.0
  %186 = vmatpush1.msra.mxu0 0.0
  %187 = vmatprep.subr.mxu0 0.0
  %188 = vmatpush1.msra.mxu0 0.0
  %189 = vmatprep.subr.mxu0 0.0
  %190 = vmatpush1.msra.mxu0 0.0
  %191 = vmatprep.mubr.f32.mxu0 0.0
  %192 = vmatmul.mubr.f32.gmra.mrb[0].mxu0 %v50
  %v193 = vpop.f32.mrb[0].mxu0
  %v194 = vadd.f32 %v126, %v193
  %v195 = vpop.f32.mrb[0].mxu0
  %196 = vdwg.mxu0
  %v197 = vld [vmem:[%s6] sm:$0xff]
  %v198 = vld [vmem:[%s6 + $0x8] sm:$0xff]
  %v199 = vld [vmem:[%s6 + $0x10] sm:$0xff]
  %v200 = vld [vmem:[%s6 + $0x18] sm:$0xff]
  %v201 = vld [vmem:[%s9] sm:$0x1]
  %202 = vmatprep.subr.mxu0 0.0
  %203 = vmatpush1.msra.mxu0 %v197
  %204 = vmatprep.subr.mxu0 0.0
  %205 = vmatpush1.msra.mxu0 %v198
  %206 = vmatprep.subr.mxu0 0.0
  %207 = vmatpush1.msra.mxu0 %v199
  %208 = vmatprep.subr.mxu0 0.0
  %209 = vmatpush1.msra.mxu0 %v200
  %210 = vmatprep.subr.mxu0 0.0
  %211 = vmatpush1.msra.mxu0 0.0
  %212 = vmatprep.subr.mxu0 0.0
  %213 = vmatpush1.msra.mxu0 0.0
  %214 = vmatprep.subr.mxu0 0.0
  %215 = vmatpush1.msra.mxu0 0.0
  %216 = vmatprep.subr.mxu0 0.0
  %217 = vmatpush1.msra.mxu0 0.0
  %218 = vmatprep.subr.mxu0 0.0
  %219 = vmatpush1.msra.mxu0 0.0
  %220 = vmatprep.subr.mxu0 0.0
  %221 = vmatpush1.msra.mxu0 0.0
  %222 = vmatprep.subr.mxu0 0.0
  %223 = vmatpush1.msra.mxu0 0.0
  %224 = vmatprep.subr.mxu0 0.0
  %225 = vmatpush1.msra.mxu0 0.0
  %226 = vmatprep.subr.mxu0 0.0
  %227 = vmatpush1.msra.mxu0 0.0
  %228 = vmatprep.subr.mxu0 0.0
  %229 = vmatpush1.msra.mxu0 0.0
  %230 = vmatprep.subr.mxu0 0.0
  %231 = vmatpush1.msra.mxu0 0.0
  %232 = vmatprep.subr.mxu0 0.0
  %233 = vmatpush1.msra.mxu0 0.0
  %234 = vmatprep.subr.mxu0 0.0
  %235 = vmatpush1.msra.mxu0 0.0
  %236 = vmatprep.subr.mxu0 0.0
  %237 = vmatpush1.msra.mxu0 0.0
  %238 = vmatprep.subr.mxu0 0.0
  %239 = vmatpush1.msra.mxu0 0.0
  %240 = vmatprep.subr.mxu0 0.0
  %241 = vmatpush1.msra.mxu0 0.0
  %242 = vmatprep.subr.mxu0 0.0
  %243 = vmatpush1.msra.mxu0 0.0
  %244 = vmatprep.subr.mxu0 0.0
  %245 = vmatpush1.msra.mxu0 0.0
  %246 = vmatprep.subr.mxu0 0.0
  %247 = vmatpush1.msra.mxu0 0.0
  %248 = vmatprep.subr.mxu0 0.0
  %249 = vmatpush1.msra.mxu0 0.0
  %250 = vmatprep.subr.mxu0 0.0
  %251 = vmatpush1.msra.mxu0 0.0
  %252 = vmatprep.subr.mxu0 0.0
  %253 = vmatpush1.msra.mxu0 0.0
  %254 = vmatprep.subr.mxu0 0.0
  %255 = vmatpush1.msra.mxu0 0.0
  %256 = vmatprep.subr.mxu0 0.0
  %257 = vmatpush1.msra.mxu0 0.0
  %258 = vmatprep.subr.mxu0 0.0
  %259 = vmatpush1.msra.mxu0 0.0
  %260 = vmatprep.subr.mxu0 0.0
  %261 = vmatpush1.msra.mxu0 0.0
  %262 = vmatprep.subr.mxu0 0.0
  %263 = vmatpush1.msra.mxu0 0.0
  %264 = vmatprep.subr.mxu0 0.0
  %265 = vmatpush1.msra.mxu0 0.0
  %266 = vmatprep.mubr.f32.mxu0 0.0
  %267 = vmatmul.mubr.f32.gmra.mrb[0].mxu0 %v50
  %v268 = vpop.f32.mrb[0].mxu0
  %v269 = vadd.f32 %v201, %v268
  %v270 = vpop.f32.mrb[0].mxu0
  %271 = vdwg.mxu0
  %v272 = vld [vmem:[%s0] sm:$0x1]
  %v273 = vadd.f32 %v272, %v119
  %v274 = vxor.u32 %v273, 2147483648
  %v275 = vmul.f32 %v274, 1.442695
  %v276 = vpow.pop %v275
  %v277 = vadd.f32 %v276, 1.0
  %v278 = vrcp.pop %v277
  %v279 = vmul.f32 1.0, %v278
  %v280 = vld [vmem:[%s1] sm:$0x1]
  %v281 = vadd.f32 %v280, %v194
  %v282 = vxor.u32 %v281, 2147483648
  %v283 = vmul.f32 %v282, 1.442695
  %v284 = vpow.pop %v283
  %v285 = vadd.f32 %v284, 1.0
  %v286 = vrcp.pop %v285
  %v287 = vmul.f32 1.0, %v286
  %v288 = vld [vmem:[%s2] sm:$0x1]
  %v289 = vmul.f32 %v279, %v269
  %v290 = vadd.f32 %v288, %v289
  %v291 = vtanh.pop %v290
  %v292 = vsub.f32 1.0, %v287
  %v293 = vmul.f32 %v292, %v291
  %v294 = vmul.f32 %v287, %v42
  %v295 = vadd.f32 %v293, %v294
  %vm296 = vcmask 253952
  %297 = vst.msk [vmem:[%s10] sm:$0x1] %vm296, %v295
  %v298 = vld [vmem:[%s4] sm:$0xff]
  %v299 = vld [vmem:[%s4 + $0x8] sm:$0xff]
  %v300 = vld [vmem:[%s4 + $0x10] sm:$0xff]
  %v301 = vld [vmem:[%s4 + $0x18] sm:$0xff]
  %v302 = vld [vmem:[%s7] sm:$0x1]
  %v304 = vsel %vm48, %v295, 0
  %306 = vmatprep.subr.mxu0 0.0
  %307 = vmatpush1.msra.mxu0 %v298
  %308 = vmatprep.subr.mxu0 0.0
  %309 = vmatpush1.msra.mxu0 %v299
  %310 = vmatprep.subr.mxu0 0.0
  %311 = vmatpush1.msra.mxu0 %v300
  %312 = vmatprep.subr.mxu0 0.0
  %313 = vmatpush1.msra.mxu0 %v301
  %314 = vmatprep.subr.mxu0 0.0
  %315 = vmatpush1.msra.mxu0 0.0
  %316 = vmatprep.subr.mxu0 0.0
  %317 = vmatpush1.msra.mxu0 0.0
  %318 = vmatprep.subr.mxu0 0.0
  %319 = vmatpush1.msra.mxu0 0.0
  %320 = vmatprep.subr.mxu0 0.0
  %321 = vmatpush1.msra.mxu0 0.0
  %322 = vmatprep.subr.mxu0 0.0
  %323 = vmatpush1.msra.mxu0 0.0
  %324 = vmatprep.subr.mxu0 0.0
  %325 = vmatpush1.msra.mxu0 0.0
  %326 = vmatprep.subr.mxu0 0.0
  %327 = vmatpush1.msra.mxu0 0.0
  %328 = vmatprep.subr.mxu0 0.0
  %329 = vmatpush1.msra.mxu0 0.0
  %330 = vmatprep.subr.mxu0 0.0
  %331 = vmatpush1.msra.mxu0 0.0
  %332 = vmatprep.subr.mxu0 0.0
  %333 = vmatpush1.msra.mxu0 0.0
  %334 = vmatprep.subr.mxu0 0.0
  %335 = vmatpush1.msra.mxu0 0.0
  %336 = vmatprep.subr.mxu0 0.0
  %337 = vmatpush1.msra.mxu0 0.0
  %338 = vmatprep.subr.mxu0 0.0
  %339 = vmatpush1.msra.mxu0 0.0
  %340 = vmatprep.subr.mxu0 0.0
  %341 = vmatpush1.msra.mxu0 0.0
  %342 = vmatprep.subr.mxu0 0.0
  %343 = vmatpush1.msra.mxu0 0.0
  %344 = vmatprep.subr.mxu0 0.0
  %345 = vmatpush1.msra.mxu0 0.0
  %346 = vmatprep.subr.mxu0 0.0
  %347 = vmatpush1.msra.mxu0 0.0
  %348 = vmatprep.subr.mxu0 0.0
  %349 = vmatpush1.msra.mxu0 0.0
  %350 = vmatprep.subr.mxu0 0.0
  %351 = vmatpush1.msra.mxu0 0.0
  %352 = vmatprep.subr.mxu0 0.0
  %353 = vmatpush1.msra.mxu0 0.0
  %354 = vmatprep.subr.mxu0 0.0
  %355 = vmatpush1.msra.mxu0 0.0
  %356 = vmatprep.subr.mxu0 0.0
  %357 = vmatpush1.msra.mxu0 0.0
  %358 = vmatprep.subr.mxu0 0.0
  %359 = vmatpush1.msra.mxu0 0.0
  %360 = vmatprep.subr.mxu0 0.0
  %361 = vmatpush1.msra.mxu0 0.0
  %362 = vmatprep.subr.mxu0 0.0
  %363 = vmatpush1.msra.mxu0 0.0
  %364 = vmatprep.subr.mxu0 0.0
  %365 = vmatpush1.msra.mxu0 0.0
  %366 = vmatprep.subr.mxu0 0.0
  %367 = vmatpush1.msra.mxu0 0.0
  %368 = vmatprep.subr.mxu0 0.0
  %369 = vmatpush1.msra.mxu0 0.0
  %370 = vmatprep.mubr.f32.mxu0 0.0
  %371 = vmatmul.mubr.f32.gmra.mrb[0].mxu0 %v304
  %v372 = vpop.f32.mrb[0].mxu0
  %v373 = vadd.f32 %v302, %v372
  %v374 = vpop.f32.mrb[0].mxu0
  %375 = vdwg.mxu0
  %v376 = vld [vmem:[%s5] sm:$0xff]
  %v377 = vld [vmem:[%s5 + $0x8] sm:$0xff]
  %v378 = vld [vmem:[%s5 + $0x10] sm:$0xff]
  %v379 = vld [vmem:[%s5 + $0x18] sm:$0xff]
  %v380 = vld [vmem:[%s8] sm:$0x1]
  %381 = vmatprep.subr.mxu0 0.0
  %382 = vmatpush1.msra.mxu0 %v376
  %383 = vmatprep.subr.mxu0 0.0
  %384 = vmatpush1.msra.mxu0 %v377
  %385 = vmatprep.subr.mxu0 0.0
  %386 = vmatpush1.msra.mxu0 %v378
  %387 = vmatprep.subr.mxu0 0.0
  %388 = vmatpush1.msra.mxu0 %v379
  %389 = vmatprep.subr.mxu0 0.0
  %390 = vmatpush1.msra.mxu0 0.0
  %391 = vmatprep.subr.mxu0 0.0
  %392 = vmatpush1.msra.mxu0 0.0
  %393 = vmatprep.subr.mxu0 0.0
  %394 = vmatpush1.msra.mxu0 0.0
  %395 = vmatprep.subr.mxu0 0.0
  %396 = vmatpush1.msra.mxu0 0.0
  %397 = vmatprep.subr.mxu0 0.0
  %398 = vmatpush1.msra.mxu0 0.0
  %399 = vmatprep.subr.mxu0 0.0
  %400 = vmatpush1.msra.mxu0 0.0
  %401 = vmatprep.subr.mxu0 0.0
  %402 = vmatpush1.msra.mxu0 0.0
  %403 = vmatprep.subr.mxu0 0.0
  %404 = vmatpush1.msra.mxu0 0.0
  %405 = vmatprep.subr.mxu0 0.0
  %406 = vmatpush1.msra.mxu0 0.0
  %407 = vmatprep.subr.mxu0 0.0
  %408 = vmatpush1.msra.mxu0 0.0
  %409 = vmatprep.subr.mxu0 0.0
  %410 = vmatpush1.msra.mxu0 0.0
  %411 = vmatprep.subr.mxu0 0.0
  %412 = vmatpush1.msra.mxu0 0.0
  %413 = vmatprep.subr.mxu0 0.0
  %414 = vmatpush1.msra.mxu0 0.0
  %415 = vmatprep.subr.mxu0 0.0
  %416 = vmatpush1.msra.mxu0 0.0
  %417 = vmatprep.subr.mxu0 0.0
  %418 = vmatpush1.msra.mxu0 0.0
  %419 = vmatprep.subr.mxu0 0.0
  %420 = vmatpush1.msra.mxu0 0.0
  %421 = vmatprep.subr.mxu0 0.0
  %422 = vmatpush1.msra.mxu0 0.0
  %423 = vmatprep.subr.mxu0 0.0
  %424 = vmatpush1.msra.mxu0 0.0
  %425 = vmatprep.subr.mxu0 0.0
  %426 = vmatpush1.msra.mxu0 0.0
  %427 = vmatprep.subr.mxu0 0.0
  %428 = vmatpush1.msra.mxu0 0.0
  %429 = vmatprep.subr.mxu0 0.0
  %430 = vmatpush1.msra.mxu0 0.0
  %431 = vmatprep.subr.mxu0 0.0
  %432 = vmatpush1.msra.mxu0 0.0
  %433 = vmatprep.subr.mxu0 0.0
  %434 = vmatpush1.msra.mxu0 0.0
  %435 = vmatprep.subr.mxu0 0.0
  %436 = vmatpush1.msra.mxu0 0.0
  %437 = vmatprep.subr.mxu0 0.0
  %438 = vmatpush1.msra.mxu0 0.0
  %439 = vmatprep.subr.mxu0 0.0
  %440 = vmatpush1.msra.mxu0 0.0
  %441 = vmatprep.subr.mxu0 0.0
  %442 = vmatpush1.msra.mxu0 0.0
  %443 = vmatprep.subr.mxu0 0.0
  %444 = vmatpush1.msra.mxu0 0.0
  %445 = vmatprep.mubr.f32.mxu0 0.0
  %446 = vmatmul.mubr.f32.gmra.mrb[0].mxu0 %v304
  %v447 = vpop.f32.mrb[0].mxu0
  %v448 = vadd.f32 %v380, %v447
  %v449 = vpop.f32.mrb[0].mxu0
  %450 = vdwg.mxu0
  %v451 = vld [vmem:[%s6] sm:$0xff]
  %v452 = vld [vmem:[%s6 + $0x8] sm:$0xff]
  %v453 = vld [vmem:[%s6 + $0x10] sm:$0xff]
  %v454 = vld [vmem:[%s6 + $0x18] sm:$0xff]
  %v455 = vld [vmem:[%s9] sm:$0x1]
  %456 = vmatprep.subr.mxu0 0.0
  %457 = vmatpush1.msra.mxu0 %v451
  %458 = vmatprep.subr.mxu0 0.0
  %459 = vmatpush1.msra.mxu0 %v452
  %460 = vmatprep.subr.mxu0 0.0
  %461 = vmatpush1.msra.mxu0 %v453
  %462 = vmatprep.subr.mxu0 0.0
  %463 = vmatpush1.msra.mxu0 %v454
  %464 = vmatprep.subr.mxu0 0.0
  %465 = vmatpush1.msra.mxu0 0.0
  %466 = vmatprep.subr.mxu0 0.0
  %467 = vmatpush1.msra.mxu0 0.0
  %468 = vmatprep.subr.mxu0 0.0
  %469 = vmatpush1.msra.mxu0 0.0
  %470 = vmatprep.subr.mxu0 0.0
  %471 = vmatpush1.msra.mxu0 0.0
  %472 = vmatprep.subr.mxu0 0.0
  %473 = vmatpush1.msra.mxu0 0.0
  %474 = vmatprep.subr.mxu0 0.0
  %475 = vmatpush1.msra.mxu0 0.0
  %476 = vmatprep.subr.mxu0 0.0
  %477 = vmatpush1.msra.mxu0 0.0
  %478 = vmatprep.subr.mxu0 0.0
  %479 = vmatpush1.msra.mxu0 0.0
  %480 = vmatprep.subr.mxu0 0.0
  %481 = vmatpush1.msra.mxu0 0.0
  %482 = vmatprep.subr.mxu0 0.0
  %483 = vmatpush1.msra.mxu0 0.0
  %484 = vmatprep.subr.mxu0 0.0
  %485 = vmatpush1.msra.mxu0 0.0
  %486 = vmatprep.subr.mxu0 0.0
  %487 = vmatpush1.msra.mxu0 0.0
  %488 = vmatprep.subr.mxu0 0.0
  %489 = vmatpush1.msra.mxu0 0.0
  %490 = vmatprep.subr.mxu0 0.0
  %491 = vmatpush1.msra.mxu0 0.0
  %492 = vmatprep.subr.mxu0 0.0
  %493 = vmatpush1.msra.mxu0 0.0
  %494 = vmatprep.subr.mxu0 0.0
  %495 = vmatpush1.msra.mxu0 0.0
  %496 = vmatprep.subr.mxu0 0.0
  %497 = vmatpush1.msra.mxu0 0.0
  %498 = vmatprep.subr.mxu0 0.0
  %499 = vmatpush1.msra.mxu0 0.0
  %500 = vmatprep.subr.mxu0 0.0
  %501 = vmatpush1.msra.mxu0 0.0
  %502 = vmatprep.subr.mxu0 0.0
  %503 = vmatpush1.msra.mxu0 0.0
  %504 = vmatprep.subr.mxu0 0.0
  %505 = vmatpush1.msra.mxu0 0.0
  %506 = vmatprep.subr.mxu0 0.0
  %507 = vmatpush1.msra.mxu0 0.0
  %508 = vmatprep.subr.mxu0 0.0
  %509 = vmatpush1.msra.mxu0 0.0
  %510 = vmatprep.subr.mxu0 0.0
  %511 = vmatpush1.msra.mxu0 0.0
  %512 = vmatprep.subr.mxu0 0.0
  %513 = vmatpush1.msra.mxu0 0.0
  %514 = vmatprep.subr.mxu0 0.0
  %515 = vmatpush1.msra.mxu0 0.0
  %516 = vmatprep.subr.mxu0 0.0
  %517 = vmatpush1.msra.mxu0 0.0
  %518 = vmatprep.subr.mxu0 0.0
  %519 = vmatpush1.msra.mxu0 0.0
  %520 = vmatprep.mubr.f32.mxu0 0.0
  %521 = vmatmul.mubr.f32.gmra.mrb[0].mxu0 %v304
  %v522 = vpop.f32.mrb[0].mxu0
  %v523 = vadd.f32 %v455, %v522
  %v524 = vpop.f32.mrb[0].mxu0
  %525 = vdwg.mxu0
  %v526 = vld [vmem:[%s0 + $0x1] sm:$0x1]
  %v527 = vadd.f32 %v526, %v373
  %v528 = vxor.u32 %v527, 2147483648
  %v529 = vmul.f32 %v528, 1.442695
  %v530 = vpow.pop %v529
  %v531 = vadd.f32 %v530, 1.0
  %v532 = vrcp.pop %v531
  %v533 = vmul.f32 1.0, %v532
  %v534 = vld [vmem:[%s1 + $0x1] sm:$0x1]
  %v535 = vadd.f32 %v534, %v448
  %v536 = vxor.u32 %v535, 2147483648
  %v537 = vmul.f32 %v536, 1.442695
  %v538 = vpow.pop %v537
  %v539 = vadd.f32 %v538, 1.0
  %v540 = vrcp.pop %v539
  %v541 = vmul.f32 1.0, %v540
  %v542 = vld [vmem:[%s2 + $0x1] sm:$0x1]
  %v543 = vmul.f32 %v533, %v523
  %v544 = vadd.f32 %v542, %v543
  %v545 = vtanh.pop %v544
  %v546 = vsub.f32 1.0, %v541
  %v547 = vmul.f32 %v546, %v545
  %v548 = vmul.f32 %v541, %v295
  %v549 = vadd.f32 %v547, %v548
  %550 = vst.msk [vmem:[%s10 + $0x1] sm:$0x1] %vm296, %v549
  %v551 = vld [vmem:[%s4] sm:$0xff]
  %v552 = vld [vmem:[%s4 + $0x8] sm:$0xff]
  %v553 = vld [vmem:[%s4 + $0x10] sm:$0xff]
  %v554 = vld [vmem:[%s4 + $0x18] sm:$0xff]
  %v555 = vld [vmem:[%s7] sm:$0x1]
  %v557 = vsel %vm48, %v549, 0
  %559 = vmatprep.subr.mxu0 0.0
  %560 = vmatpush1.msra.mxu0 %v551
  %561 = vmatprep.subr.mxu0 0.0
  %562 = vmatpush1.msra.mxu0 %v552
  %563 = vmatprep.subr.mxu0 0.0
  %564 = vmatpush1.msra.mxu0 %v553
  %565 = vmatprep.subr.mxu0 0.0
  %566 = vmatpush1.msra.mxu0 %v554
  %567 = vmatprep.subr.mxu0 0.0
  %568 = vmatpush1.msra.mxu0 0.0
  %569 = vmatprep.subr.mxu0 0.0
  %570 = vmatpush1.msra.mxu0 0.0
  %571 = vmatprep.subr.mxu0 0.0
  %572 = vmatpush1.msra.mxu0 0.0
  %573 = vmatprep.subr.mxu0 0.0
  %574 = vmatpush1.msra.mxu0 0.0
  %575 = vmatprep.subr.mxu0 0.0
  %576 = vmatpush1.msra.mxu0 0.0
  %577 = vmatprep.subr.mxu0 0.0
  %578 = vmatpush1.msra.mxu0 0.0
  %579 = vmatprep.subr.mxu0 0.0
  %580 = vmatpush1.msra.mxu0 0.0
  %581 = vmatprep.subr.mxu0 0.0
  %582 = vmatpush1.msra.mxu0 0.0
  %583 = vmatprep.subr.mxu0 0.0
  %584 = vmatpush1.msra.mxu0 0.0
  %585 = vmatprep.subr.mxu0 0.0
  %586 = vmatpush1.msra.mxu0 0.0
  %587 = vmatprep.subr.mxu0 0.0
  %588 = vmatpush1.msra.mxu0 0.0
  %589 = vmatprep.subr.mxu0 0.0
  %590 = vmatpush1.msra.mxu0 0.0
  %591 = vmatprep.subr.mxu0 0.0
  %592 = vmatpush1.msra.mxu0 0.0
  %593 = vmatprep.subr.mxu0 0.0
  %594 = vmatpush1.msra.mxu0 0.0
  %595 = vmatprep.subr.mxu0 0.0
  %596 = vmatpush1.msra.mxu0 0.0
  %597 = vmatprep.subr.mxu0 0.0
  %598 = vmatpush1.msra.mxu0 0.0
  %599 = vmatprep.subr.mxu0 0.0
  %600 = vmatpush1.msra.mxu0 0.0
  %601 = vmatprep.subr.mxu0 0.0
  %602 = vmatpush1.msra.mxu0 0.0
  %603 = vmatprep.subr.mxu0 0.0
  %604 = vmatpush1.msra.mxu0 0.0
  %605 = vmatprep.subr.mxu0 0.0
  %606 = vmatpush1.msra.mxu0 0.0
  %607 = vmatprep.subr.mxu0 0.0
  %608 = vmatpush1.msra.mxu0 0.0
  %609 = vmatprep.subr.mxu0 0.0
  %610 = vmatpush1.msra.mxu0 0.0
  %611 = vmatprep.subr.mxu0 0.0
  %612 = vmatpush1.msra.mxu0 0.0
  %613 = vmatprep.subr.mxu0 0.0
  %614 = vmatpush1.msra.mxu0 0.0
  %615 = vmatprep.subr.mxu0 0.0
  %616 = vmatpush1.msra.mxu0 0.0
  %617 = vmatprep.subr.mxu0 0.0
  %618 = vmatpush1.msra.mxu0 0.0
  %619 = vmatprep.subr.mxu0 0.0
  %620 = vmatpush1.msra.mxu0 0.0
  %621 = vmatprep.subr.mxu0 0.0
  %622 = vmatpush1.msra.mxu0 0.0
  %623 = vmatprep.mubr.f32.mxu0 0.0
  %624 = vmatmul.mubr.f32.gmra.mrb[0].mxu0 %v557
  %v625 = vpop.f32.mrb[0].mxu0
  %v626 = vadd.f32 %v555, %v625
  %v627 = vpop.f32.mrb[0].mxu0
  %628 = vdwg.mxu0
  %v629 = vld [vmem:[%s5] sm:$0xff]
  %v630 = vld [vmem:[%s5 + $0x8] sm:$0xff]
  %v631 = vld [vmem:[%s5 + $0x10] sm:$0xff]
  %v632 = vld [vmem:[%s5 + $0x18] sm:$0xff]
  %v633 = vld [vmem:[%s8] sm:$0x1]
  %634 = vmatprep.subr.mxu0 0.0
  %635 = vmatpush1.msra.mxu0 %v629
  %636 = vmatprep.subr.mxu0 0.0
  %637 = vmatpush1.msra.mxu0 %v630
  %638 = vmatprep.subr.mxu0 0.0
  %639 = vmatpush1.msra.mxu0 %v631
  %640 = vmatprep.subr.mxu0 0.0
  %641 = vmatpush1.msra.mxu0 %v632
  %642 = vmatprep.subr.mxu0 0.0
  %643 = vmatpush1.msra.mxu0 0.0
  %644 = vmatprep.subr.mxu0 0.0
  %645 = vmatpush1.msra.mxu0 0.0
  %646 = vmatprep.subr.mxu0 0.0
  %647 = vmatpush1.msra.mxu0 0.0
  %648 = vmatprep.subr.mxu0 0.0
  %649 = vmatpush1.msra.mxu0 0.0
  %650 = vmatprep.subr.mxu0 0.0
  %651 = vmatpush1.msra.mxu0 0.0
  %652 = vmatprep.subr.mxu0 0.0
  %653 = vmatpush1.msra.mxu0 0.0
  %654 = vmatprep.subr.mxu0 0.0
  %655 = vmatpush1.msra.mxu0 0.0
  %656 = vmatprep.subr.mxu0 0.0
  %657 = vmatpush1.msra.mxu0 0.0
  %658 = vmatprep.subr.mxu0 0.0
  %659 = vmatpush1.msra.mxu0 0.0
  %660 = vmatprep.subr.mxu0 0.0
  %661 = vmatpush1.msra.mxu0 0.0
  %662 = vmatprep.subr.mxu0 0.0
  %663 = vmatpush1.msra.mxu0 0.0
  %664 = vmatprep.subr.mxu0 0.0
  %665 = vmatpush1.msra.mxu0 0.0
  %666 = vmatprep.subr.mxu0 0.0
  %667 = vmatpush1.msra.mxu0 0.0
  %668 = vmatprep.subr.mxu0 0.0
  %669 = vmatpush1.msra.mxu0 0.0
  %670 = vmatprep.subr.mxu0 0.0
  %671 = vmatpush1.msra.mxu0 0.0
  %672 = vmatprep.subr.mxu0 0.0
  %673 = vmatpush1.msra.mxu0 0.0
  %674 = vmatprep.subr.mxu0 0.0
  %675 = vmatpush1.msra.mxu0 0.0
  %676 = vmatprep.subr.mxu0 0.0
  %677 = vmatpush1.msra.mxu0 0.0
  %678 = vmatprep.subr.mxu0 0.0
  %679 = vmatpush1.msra.mxu0 0.0
  %680 = vmatprep.subr.mxu0 0.0
  %681 = vmatpush1.msra.mxu0 0.0
  %682 = vmatprep.subr.mxu0 0.0
  %683 = vmatpush1.msra.mxu0 0.0
  %684 = vmatprep.subr.mxu0 0.0
  %685 = vmatpush1.msra.mxu0 0.0
  %686 = vmatprep.subr.mxu0 0.0
  %687 = vmatpush1.msra.mxu0 0.0
  %688 = vmatprep.subr.mxu0 0.0
  %689 = vmatpush1.msra.mxu0 0.0
  %690 = vmatprep.subr.mxu0 0.0
  %691 = vmatpush1.msra.mxu0 0.0
  %692 = vmatprep.subr.mxu0 0.0
  %693 = vmatpush1.msra.mxu0 0.0
  %694 = vmatprep.subr.mxu0 0.0
  %695 = vmatpush1.msra.mxu0 0.0
  %696 = vmatprep.subr.mxu0 0.0
  %697 = vmatpush1.msra.mxu0 0.0
  %698 = vmatprep.mubr.f32.mxu0 0.0
  %699 = vmatmul.mubr.f32.gmra.mrb[0].mxu0 %v557
  %v700 = vpop.f32.mrb[0].mxu0
  %v701 = vadd.f32 %v633, %v700
  %v702 = vpop.f32.mrb[0].mxu0
  %703 = vdwg.mxu0
  %v704 = vld [vmem:[%s6] sm:$0xff]
  %v705 = vld [vmem:[%s6 + $0x8] sm:$0xff]
  %v706 = vld [vmem:[%s6 + $0x10] sm:$0xff]
  %v707 = vld [vmem:[%s6 + $0x18] sm:$0xff]
  %v708 = vld [vmem:[%s9] sm:$0x1]
  %709 = vmatprep.subr.mxu0 0.0
  %710 = vmatpush1.msra.mxu0 %v704
  %711 = vmatprep.subr.mxu0 0.0
  %712 = vmatpush1.msra.mxu0 %v705
  %713 = vmatprep.subr.mxu0 0.0
  %714 = vmatpush1.msra.mxu0 %v706
  %715 = vmatprep.subr.mxu0 0.0
  %716 = vmatpush1.msra.mxu0 %v707
  %717 = vmatprep.subr.mxu0 0.0
  %718 = vmatpush1.msra.mxu0 0.0
  %719 = vmatprep.subr.mxu0 0.0
  %720 = vmatpush1.msra.mxu0 0.0
  %721 = vmatprep.subr.mxu0 0.0
  %722 = vmatpush1.msra.mxu0 0.0
  %723 = vmatprep.subr.mxu0 0.0
  %724 = vmatpush1.msra.mxu0 0.0
  %725 = vmatprep.subr.mxu0 0.0
  %726 = vmatpush1.msra.mxu0 0.0
  %727 = vmatprep.subr.mxu0 0.0
  %728 = vmatpush1.msra.mxu0 0.0
  %729 = vmatprep.subr.mxu0 0.0
  %730 = vmatpush1.msra.mxu0 0.0
  %731 = vmatprep.subr.mxu0 0.0
  %732 = vmatpush1.msra.mxu0 0.0
  %733 = vmatprep.subr.mxu0 0.0
  %734 = vmatpush1.msra.mxu0 0.0
  %735 = vmatprep.subr.mxu0 0.0
  %736 = vmatpush1.msra.mxu0 0.0
  %737 = vmatprep.subr.mxu0 0.0
  %738 = vmatpush1.msra.mxu0 0.0
  %739 = vmatprep.subr.mxu0 0.0
  %740 = vmatpush1.msra.mxu0 0.0
  %741 = vmatprep.subr.mxu0 0.0
  %742 = vmatpush1.msra.mxu0 0.0
  %743 = vmatprep.subr.mxu0 0.0
  %744 = vmatpush1.msra.mxu0 0.0
  %745 = vmatprep.subr.mxu0 0.0
  %746 = vmatpush1.msra.mxu0 0.0
  %747 = vmatprep.subr.mxu0 0.0
  %748 = vmatpush1.msra.mxu0 0.0
  %749 = vmatprep.subr.mxu0 0.0
  %750 = vmatpush1.msra.mxu0 0.0
  %751 = vmatprep.subr.mxu0 0.0
  %752 = vmatpush1.msra.mxu0 0.0
  %753 = vmatprep.subr.mxu0 0.0
  %754 = vmatpush1.msra.mxu0 0.0
  %755 = vmatprep.subr.mxu0 0.0
  %756 = vmatpush1.msra.mxu0 0.0
  %757 = vmatprep.subr.mxu0 0.0
  %758 = vmatpush1.msra.mxu0 0.0
  %759 = vmatprep.subr.mxu0 0.0
  %760 = vmatpush1.msra.mxu0 0.0
  %761 = vmatprep.subr.mxu0 0.0
  %762 = vmatpush1.msra.mxu0 0.0
  %763 = vmatprep.subr.mxu0 0.0
  %764 = vmatpush1.msra.mxu0 0.0
  %765 = vmatprep.subr.mxu0 0.0
  %766 = vmatpush1.msra.mxu0 0.0
  %767 = vmatprep.subr.mxu0 0.0
  %768 = vmatpush1.msra.mxu0 0.0
  %769 = vmatprep.subr.mxu0 0.0
  %770 = vmatpush1.msra.mxu0 0.0
  %771 = vmatprep.subr.mxu0 0.0
  %772 = vmatpush1.msra.mxu0 0.0
  %773 = vmatprep.mubr.f32.mxu0 0.0
  %774 = vmatmul.mubr.f32.gmra.mrb[0].mxu0 %v557
  %v775 = vpop.f32.mrb[0].mxu0
  %v776 = vadd.f32 %v708, %v775
  %v777 = vpop.f32.mrb[0].mxu0
  %778 = vdwg.mxu0
  %v779 = vld [vmem:[%s0 + $0x2] sm:$0x1]
  %v780 = vadd.f32 %v779, %v626
  %v781 = vxor.u32 %v780, 2147483648
  %v782 = vmul.f32 %v781, 1.442695
  %v783 = vpow.pop %v782
  %v784 = vadd.f32 %v783, 1.0
  %v785 = vrcp.pop %v784
  %v786 = vmul.f32 1.0, %v785
  %v787 = vld [vmem:[%s1 + $0x2] sm:$0x1]
  %v788 = vadd.f32 %v787, %v701
  %v789 = vxor.u32 %v788, 2147483648
  %v790 = vmul.f32 %v789, 1.442695
  %v791 = vpow.pop %v790
  %v792 = vadd.f32 %v791, 1.0
  %v793 = vrcp.pop %v792
  %v794 = vmul.f32 1.0, %v793
  %v795 = vld [vmem:[%s2 + $0x2] sm:$0x1]
  %v796 = vmul.f32 %v786, %v776
  %v797 = vadd.f32 %v795, %v796
  %v798 = vtanh.pop %v797
  %v799 = vsub.f32 1.0, %v794
  %v800 = vmul.f32 %v799, %v798
  %v801 = vmul.f32 %v794, %v549
  %v802 = vadd.f32 %v800, %v801
  %803 = vst.msk [vmem:[%s10 + $0x2] sm:$0x1] %vm296, %v802
  %v804 = vld [vmem:[%s4] sm:$0xff]
  %v805 = vld [vmem:[%s4 + $0x8] sm:$0xff]
  %v806 = vld [vmem:[%s4 + $0x10] sm:$0xff]
  %v807 = vld [vmem:[%s4 + $0x18] sm:$0xff]
  %v808 = vld [vmem:[%s7] sm:$0x1]
  %v810 = vsel %vm48, %v802, 0
  %812 = vmatprep.subr.mxu0 0.0
  %813 = vmatpush1.msra.mxu0 %v804
  %814 = vmatprep.subr.mxu0 0.0
  %815 = vmatpush1.msra.mxu0 %v805
  %816 = vmatprep.subr.mxu0 0.0
  %817 = vmatpush1.msra.mxu0 %v806
  %818 = vmatprep.subr.mxu0 0.0
  %819 = vmatpush1.msra.mxu0 %v807
  %820 = vmatprep.subr.mxu0 0.0
  %821 = vmatpush1.msra.mxu0 0.0
  %822 = vmatprep.subr.mxu0 0.0
  %823 = vmatpush1.msra.mxu0 0.0
  %824 = vmatprep.subr.mxu0 0.0
  %825 = vmatpush1.msra.mxu0 0.0
  %826 = vmatprep.subr.mxu0 0.0
  %827 = vmatpush1.msra.mxu0 0.0
  %828 = vmatprep.subr.mxu0 0.0
  %829 = vmatpush1.msra.mxu0 0.0
  %830 = vmatprep.subr.mxu0 0.0
  %831 = vmatpush1.msra.mxu0 0.0
  %832 = vmatprep.subr.mxu0 0.0
  %833 = vmatpush1.msra.mxu0 0.0
  %834 = vmatprep.subr.mxu0 0.0
  %835 = vmatpush1.msra.mxu0 0.0
  %836 = vmatprep.subr.mxu0 0.0
  %837 = vmatpush1.msra.mxu0 0.0
  %838 = vmatprep.subr.mxu0 0.0
  %839 = vmatpush1.msra.mxu0 0.0
  %840 = vmatprep.subr.mxu0 0.0
  %841 = vmatpush1.msra.mxu0 0.0
  %842 = vmatprep.subr.mxu0 0.0
  %843 = vmatpush1.msra.mxu0 0.0
  %844 = vmatprep.subr.mxu0 0.0
  %845 = vmatpush1.msra.mxu0 0.0
  %846 = vmatprep.subr.mxu0 0.0
  %847 = vmatpush1.msra.mxu0 0.0
  %848 = vmatprep.subr.mxu0 0.0
  %849 = vmatpush1.msra.mxu0 0.0
  %850 = vmatprep.subr.mxu0 0.0
  %851 = vmatpush1.msra.mxu0 0.0
  %852 = vmatprep.subr.mxu0 0.0
  %853 = vmatpush1.msra.mxu0 0.0
  %854 = vmatprep.subr.mxu0 0.0
  %855 = vmatpush1.msra.mxu0 0.0
  %856 = vmatprep.subr.mxu0 0.0
  %857 = vmatpush1.msra.mxu0 0.0
  %858 = vmatprep.subr.mxu0 0.0
  %859 = vmatpush1.msra.mxu0 0.0
  %860 = vmatprep.subr.mxu0 0.0
  %861 = vmatpush1.msra.mxu0 0.0
  %862 = vmatprep.subr.mxu0 0.0
  %863 = vmatpush1.msra.mxu0 0.0
  %864 = vmatprep.subr.mxu0 0.0
  %865 = vmatpush1.msra.mxu0 0.0
  %866 = vmatprep.subr.mxu0 0.0
  %867 = vmatpush1.msra.mxu0 0.0
  %868 = vmatprep.subr.mxu0 0.0
  %869 = vmatpush1.msra.mxu0 0.0
  %870 = vmatprep.subr.mxu0 0.0
  %871 = vmatpush1.msra.mxu0 0.0
  %872 = vmatprep.subr.mxu0 0.0
  %873 = vmatpush1.msra.mxu0 0.0
  %874 = vmatprep.subr.mxu0 0.0
  %875 = vmatpush1.msra.mxu0 0.0
  %876 = vmatprep.mubr.f32.mxu0 0.0
  %877 = vmatmul.mubr.f32.gmra.mrb[0].mxu0 %v810
  %v878 = vpop.f32.mrb[0].mxu0
  %v879 = vadd.f32 %v808, %v878
  %v880 = vpop.f32.mrb[0].mxu0
  %881 = vdwg.mxu0
  %v882 = vld [vmem:[%s5] sm:$0xff]
  %v883 = vld [vmem:[%s5 + $0x8] sm:$0xff]
  %v884 = vld [vmem:[%s5 + $0x10] sm:$0xff]
  %v885 = vld [vmem:[%s5 + $0x18] sm:$0xff]
  %v886 = vld [vmem:[%s8] sm:$0x1]
  %887 = vmatprep.subr.mxu0 0.0
  %888 = vmatpush1.msra.mxu0 %v882
  %889 = vmatprep.subr.mxu0 0.0
  %890 = vmatpush1.msra.mxu0 %v883
  %891 = vmatprep.subr.mxu0 0.0
  %892 = vmatpush1.msra.mxu0 %v884
  %893 = vmatprep.subr.mxu0 0.0
  %894 = vmatpush1.msra.mxu0 %v885
  %895 = vmatprep.subr.mxu0 0.0
  %896 = vmatpush1.msra.mxu0 0.0
  %897 = vmatprep.subr.mxu0 0.0
  %898 = vmatpush1.msra.mxu0 0.0
  %899 = vmatprep.subr.mxu0 0.0
  %900 = vmatpush1.msra.mxu0 0.0
  %901 = vmatprep.subr.mxu0 0.0
  %902 = vmatpush1.msra.mxu0 0.0
  %903 = vmatprep.subr.mxu0 0.0
  %904 = vmatpush1.msra.mxu0 0.0
  %905 = vmatprep.subr.mxu0 0.0
  %906 = vmatpush1.msra.mxu0 0.0
  %907 = vmatprep.subr.mxu0 0.0
  %908 = vmatpush1.msra.mxu0 0.0
  %909 = vmatprep.subr.mxu0 0.0
  %910 = vmatpush1.msra.mxu0 0.0
  %911 = vmatprep.subr.mxu0 0.0
  %912 = vmatpush1.msra.mxu0 0.0
  %913 = vmatprep.subr.mxu0 0.0
  %914 = vmatpush1.msra.mxu0 0.0
  %915 = vmatprep.subr.mxu0 0.0
  %916 = vmatpush1.msra.mxu0 0.0
  %917 = vmatprep.subr.mxu0 0.0
  %918 = vmatpush1.msra.mxu0 0.0
  %919 = vmatprep.subr.mxu0 0.0
  %920 = vmatpush1.msra.mxu0 0.0
  %921 = vmatprep.subr.mxu0 0.0
  %922 = vmatpush1.msra.mxu0 0.0
  %923 = vmatprep.subr.mxu0 0.0
  %924 = vmatpush1.msra.mxu0 0.0
  %925 = vmatprep.subr.mxu0 0.0
  %926 = vmatpush1.msra.mxu0 0.0
  %927 = vmatprep.subr.mxu0 0.0
  %928 = vmatpush1.msra.mxu0 0.0
  %929 = vmatprep.subr.mxu0 0.0
  %930 = vmatpush1.msra.mxu0 0.0
  %931 = vmatprep.subr.mxu0 0.0
  %932 = vmatpush1.msra.mxu0 0.0
  %933 = vmatprep.subr.mxu0 0.0
  %934 = vmatpush1.msra.mxu0 0.0
  %935 = vmatprep.subr.mxu0 0.0
  %936 = vmatpush1.msra.mxu0 0.0
  %937 = vmatprep.subr.mxu0 0.0
  %938 = vmatpush1.msra.mxu0 0.0
  %939 = vmatprep.subr.mxu0 0.0
  %940 = vmatpush1.msra.mxu0 0.0
  %941 = vmatprep.subr.mxu0 0.0
  %942 = vmatpush1.msra.mxu0 0.0
  %943 = vmatprep.subr.mxu0 0.0
  %944 = vmatpush1.msra.mxu0 0.0
  %945 = vmatprep.subr.mxu0 0.0
  %946 = vmatpush1.msra.mxu0 0.0
  %947 = vmatprep.subr.mxu0 0.0
  %948 = vmatpush1.msra.mxu0 0.0
  %949 = vmatprep.subr.mxu0 0.0
  %950 = vmatpush1.msra.mxu0 0.0
  %951 = vmatprep.mubr.f32.mxu0 0.0
  %952 = vmatmul.mubr.f32.gmra.mrb[0].mxu0 %v810
  %v953 = vpop.f32.mrb[0].mxu0
  %v954 = vadd.f32 %v886, %v953
  %v955 = vpop.f32.mrb[0].mxu0
  %956 = vdwg.mxu0
  %v957 = vld [vmem:[%s6] sm:$0xff]
  %v958 = vld [vmem:[%s6 + $0x8] sm:$0xff]
  %v959 = vld [vmem:[%s6 + $0x10] sm:$0xff]
  %v960 = vld [vmem:[%s6 + $0x18] sm:$0xff]
  %v961 = vld [vmem:[%s9] sm:$0x1]
  %962 = vmatprep.subr.mxu0 0.0
  %963 = vmatpush1.msra.mxu0 %v957
  %964 = vmatprep.subr.mxu0 0.0
  %965 = vmatpush1.msra.mxu0 %v958
  %966 = vmatprep.subr.mxu0 0.0
  %967 = vmatpush1.msra.mxu0 %v959
  %968 = vmatprep.subr.mxu0 0.0
  %969 = vmatpush1.msra.mxu0 %v960
  %970 = vmatprep.subr.mxu0 0.0
  %971 = vmatpush1.msra.mxu0 0.0
  %972 = vmatprep.subr.mxu0 0.0
  %973 = vmatpush1.msra.mxu0 0.0
  %974 = vmatprep.subr.mxu0 0.0
  %975 = vmatpush1.msra.mxu0 0.0
  %976 = vmatprep.subr.mxu0 0.0
  %977 = vmatpush1.msra.mxu0 0.0
  %978 = vmatprep.subr.mxu0 0.0
  %979 = vmatpush1.msra.mxu0 0.0
  %980 = vmatprep.subr.mxu0 0.0
  %981 = vmatpush1.msra.mxu0 0.0
  %982 = vmatprep.subr.mxu0 0.0
  %983 = vmatpush1.msra.mxu0 0.0
  %984 = vmatprep.subr.mxu0 0.0
  %985 = vmatpush1.msra.mxu0 0.0
  %986 = vmatprep.subr.mxu0 0.0
  %987 = vmatpush1.msra.mxu0 0.0
  %988 = vmatprep.subr.mxu0 0.0
  %989 = vmatpush1.msra.mxu0 0.0
  %990 = vmatprep.subr.mxu0 0.0
  %991 = vmatpush1.msra.mxu0 0.0
  %992 = vmatprep.subr.mxu0 0.0
  %993 = vmatpush1.msra.mxu0 0.0
  %994 = vmatprep.subr.mxu0 0.0
  %995 = vmatpush1.msra.mxu0 0.0
  %996 = vmatprep.subr.mxu0 0.0
  %997 = vmatpush1.msra.mxu0 0.0
  %998 = vmatprep.subr.mxu0 0.0
  %999 = vmatpush1.msra.mxu0 0.0
  %1000 = vmatprep.subr.mxu0 0.0
  %1001 = vmatpush1.msra.mxu0 0.0
  %1002 = vmatprep.subr.mxu0 0.0
  %1003 = vmatpush1.msra.mxu0 0.0
  %1004 = vmatprep.subr.mxu0 0.0
  %1005 = vmatpush1.msra.mxu0 0.0
  %1006 = vmatprep.subr.mxu0 0.0
  %1007 = vmatpush1.msra.mxu0 0.0
  %1008 = vmatprep.subr.mxu0 0.0
  %1009 = vmatpush1.msra.mxu0 0.0
  %1010 = vmatprep.subr.mxu0 0.0
  %1011 = vmatpush1.msra.mxu0 0.0
  %1012 = vmatprep.subr.mxu0 0.0
  %1013 = vmatpush1.msra.mxu0 0.0
  %1014 = vmatprep.subr.mxu0 0.0
  %1015 = vmatpush1.msra.mxu0 0.0
  %1016 = vmatprep.subr.mxu0 0.0
  %1017 = vmatpush1.msra.mxu0 0.0
  %1018 = vmatprep.subr.mxu0 0.0
  %1019 = vmatpush1.msra.mxu0 0.0
  %1020 = vmatprep.subr.mxu0 0.0
  %1021 = vmatpush1.msra.mxu0 0.0
  %1022 = vmatprep.subr.mxu0 0.0
  %1023 = vmatpush1.msra.mxu0 0.0
  %1024 = vmatprep.subr.mxu0 0.0
  %1025 = vmatpush1.msra.mxu0 0.0
  %1026 = vmatprep.mubr.f32.mxu0 0.0
  %1027 = vmatmul.mubr.f32.gmra.mrb[0].mxu0 %v810
  %v1028 = vpop.f32.mrb[0].mxu0
  %v1029 = vadd.f32 %v961, %v1028
  %v1030 = vpop.f32.mrb[0].mxu0
  %1031 = vdwg.mxu0
  %v1032 = vld [vmem:[%s0 + $0x3] sm:$0x1]
  %v1033 = vadd.f32 %v1032, %v879
  %v1034 = vxor.u32 %v1033, 2147483648
  %v1035 = vmul.f32 %v1034, 1.442695
  %v1036 = vpow.pop %v1035
  %v1037 = vadd.f32 %v1036, 1.0
  %v1038 = vrcp.pop %v1037
  %v1039 = vmul.f32 1.0, %v1038
  %v1040 = vld [vmem:[%s1 + $0x3] sm:$0x1]
  %v1041 = vadd.f32 %v1040, %v954
  %v1042 = vxor.u32 %v1041, 2147483648
  %v1043 = vmul.f32 %v1042, 1.442695
  %v1044 = vpow.pop %v1043
  %v1045 = vadd.f32 %v1044, 1.0
  %v1046 = vrcp.pop %v1045
  %v1047 = vmul.f32 1.0, %v1046
  %v1048 = vld [vmem:[%s2 + $0x3] sm:$0x1]
  %v1049 = vmul.f32 %v1039, %v1029
  %v1050 = vadd.f32 %v1048, %v1049
  %v1051 = vtanh.pop %v1050
  %v1052 = vsub.f32 1.0, %v1047
  %v1053 = vmul.f32 %v1052, %v1051
  %v1054 = vmul.f32 %v1047, %v802
  %v1055 = vadd.f32 %v1053, %v1054
  %1056 = vst.msk [vmem:[%s10 + $0x3] sm:$0x1] %vm296, %v1055
  %v1057 = vld [vmem:[%s4] sm:$0xff]
  %v1058 = vld [vmem:[%s4 + $0x8] sm:$0xff]
  %v1059 = vld [vmem:[%s4 + $0x10] sm:$0xff]
  %v1060 = vld [vmem:[%s4 + $0x18] sm:$0xff]
  %v1061 = vld [vmem:[%s7] sm:$0x1]
  %v1063 = vsel %vm48, %v1055, 0
  %1065 = vmatprep.subr.mxu0 0.0
  %1066 = vmatpush1.msra.mxu0 %v1057
  %1067 = vmatprep.subr.mxu0 0.0
  %1068 = vmatpush1.msra.mxu0 %v1058
  %1069 = vmatprep.subr.mxu0 0.0
  %1070 = vmatpush1.msra.mxu0 %v1059
  %1071 = vmatprep.subr.mxu0 0.0
  %1072 = vmatpush1.msra.mxu0 %v1060
  %1073 = vmatprep.subr.mxu0 0.0
  %1074 = vmatpush1.msra.mxu0 0.0
  %1075 = vmatprep.subr.mxu0 0.0
  %1076 = vmatpush1.msra.mxu0 0.0
  %1077 = vmatprep.subr.mxu0 0.0
  %1078 = vmatpush1.msra.mxu0 0.0
  %1079 = vmatprep.subr.mxu0 0.0
  %1080 = vmatpush1.msra.mxu0 0.0
  %1081 = vmatprep.subr.mxu0 0.0
  %1082 = vmatpush1.msra.mxu0 0.0
  %1083 = vmatprep.subr.mxu0 0.0
  %1084 = vmatpush1.msra.mxu0 0.0
  %1085 = vmatprep.subr.mxu0 0.0
  %1086 = vmatpush1.msra.mxu0 0.0
  %1087 = vmatprep.subr.mxu0 0.0
  %1088 = vmatpush1.msra.mxu0 0.0
  %1089 = vmatprep.subr.mxu0 0.0
  %1090 = vmatpush1.msra.mxu0 0.0
  %1091 = vmatprep.subr.mxu0 0.0
  %1092 = vmatpush1.msra.mxu0 0.0
  %1093 = vmatprep.subr.mxu0 0.0
  %1094 = vmatpush1.msra.mxu0 0.0
  %1095 = vmatprep.subr.mxu0 0.0
  %1096 = vmatpush1.msra.mxu0 0.0
  %1097 = vmatprep.subr.mxu0 0.0
  %1098 = vmatpush1.msra.mxu0 0.0
  %1099 = vmatprep.subr.mxu0 0.0
  %1100 = vmatpush1.msra.mxu0 0.0
  %1101 = vmatprep.subr.mxu0 0.0
  %1102 = vmatpush1.msra.mxu0 0.0
  %1103 = vmatprep.subr.mxu0 0.0
  %1104 = vmatpush1.msra.mxu0 0.0
  %1105 = vmatprep.subr.mxu0 0.0
  %1106 = vmatpush1.msra.mxu0 0.0
  %1107 = vmatprep.subr.mxu0 0.0
  %1108 = vmatpush1.msra.mxu0 0.0
  %1109 = vmatprep.subr.mxu0 0.0
  %1110 = vmatpush1.msra.mxu0 0.0
  %1111 = vmatprep.subr.mxu0 0.0
  %1112 = vmatpush1.msra.mxu0 0.0
  %1113 = vmatprep.subr.mxu0 0.0
  %1114 = vmatpush1.msra.mxu0 0.0
  %1115 = vmatprep.subr.mxu0 0.0
  %1116 = vmatpush1.msra.mxu0 0.0
  %1117 = vmatprep.subr.mxu0 0.0
  %1118 = vmatpush1.msra.mxu0 0.0
  %1119 = vmatprep.subr.mxu0 0.0
  %1120 = vmatpush1.msra.mxu0 0.0
  %1121 = vmatprep.subr.mxu0 0.0
  %1122 = vmatpush1.msra.mxu0 0.0
  %1123 = vmatprep.subr.mxu0 0.0
  %1124 = vmatpush1.msra.mxu0 0.0
  %1125 = vmatprep.subr.mxu0 0.0
  %1126 = vmatpush1.msra.mxu0 0.0
  %1127 = vmatprep.subr.mxu0 0.0
  %1128 = vmatpush1.msra.mxu0 0.0
  %1129 = vmatprep.mubr.f32.mxu0 0.0
  %1130 = vmatmul.mubr.f32.gmra.mrb[0].mxu0 %v1063
  %v1131 = vpop.f32.mrb[0].mxu0
  %v1132 = vadd.f32 %v1061, %v1131
  %v1133 = vpop.f32.mrb[0].mxu0
  %1134 = vdwg.mxu0
  %v1135 = vld [vmem:[%s5] sm:$0xff]
  %v1136 = vld [vmem:[%s5 + $0x8] sm:$0xff]
  %v1137 = vld [vmem:[%s5 + $0x10] sm:$0xff]
  %v1138 = vld [vmem:[%s5 + $0x18] sm:$0xff]
  %v1139 = vld [vmem:[%s8] sm:$0x1]
  %1140 = vmatprep.subr.mxu0 0.0
  %1141 = vmatpush1.msra.mxu0 %v1135
  %1142 = vmatprep.subr.mxu0 0.0
  %1143 = vmatpush1.msra.mxu0 %v1136
  %1144 = vmatprep.subr.mxu0 0.0
  %1145 = vmatpush1.msra.mxu0 %v1137
  %1146 = vmatprep.subr.mxu0 0.0
  %1147 = vmatpush1.msra.mxu0 %v1138
  %1148 = vmatprep.subr.mxu0 0.0
  %1149 = vmatpush1.msra.mxu0 0.0
  %1150 = vmatprep.subr.mxu0 0.0
  %1151 = vmatpush1.msra.mxu0 0.0
  %1152 = vmatprep.subr.mxu0 0.0
  %1153 = vmatpush1.msra.mxu0 0.0
  %1154 = vmatprep.subr.mxu0 0.0
  %1155 = vmatpush1.msra.mxu0 0.0
  %1156 = vmatprep.subr.mxu0 0.0
  %1157 = vmatpush1.msra.mxu0 0.0
  %1158 = vmatprep.subr.mxu0 0.0
  %1159 = vmatpush1.msra.mxu0 0.0
  %1160 = vmatprep.subr.mxu0 0.0
  %1161 = vmatpush1.msra.mxu0 0.0
  %1162 = vmatprep.subr.mxu0 0.0
  %1163 = vmatpush1.msra.mxu0 0.0
  %1164 = vmatprep.subr.mxu0 0.0
  %1165 = vmatpush1.msra.mxu0 0.0
  %1166 = vmatprep.subr.mxu0 0.0
  %1167 = vmatpush1.msra.mxu0 0.0
  %1168 = vmatprep.subr.mxu0 0.0
  %1169 = vmatpush1.msra.mxu0 0.0
  %1170 = vmatprep.subr.mxu0 0.0
  %1171 = vmatpush1.msra.mxu0 0.0
  %1172 = vmatprep.subr.mxu0 0.0
  %1173 = vmatpush1.msra.mxu0 0.0
  %1174 = vmatprep.subr.mxu0 0.0
  %1175 = vmatpush1.msra.mxu0 0.0
  %1176 = vmatprep.subr.mxu0 0.0
  %1177 = vmatpush1.msra.mxu0 0.0
  %1178 = vmatprep.subr.mxu0 0.0
  %1179 = vmatpush1.msra.mxu0 0.0
  %1180 = vmatprep.subr.mxu0 0.0
  %1181 = vmatpush1.msra.mxu0 0.0
  %1182 = vmatprep.subr.mxu0 0.0
  %1183 = vmatpush1.msra.mxu0 0.0
  %1184 = vmatprep.subr.mxu0 0.0
  %1185 = vmatpush1.msra.mxu0 0.0
  %1186 = vmatprep.subr.mxu0 0.0
  %1187 = vmatpush1.msra.mxu0 0.0
  %1188 = vmatprep.subr.mxu0 0.0
  %1189 = vmatpush1.msra.mxu0 0.0
  %1190 = vmatprep.subr.mxu0 0.0
  %1191 = vmatpush1.msra.mxu0 0.0
  %1192 = vmatprep.subr.mxu0 0.0
  %1193 = vmatpush1.msra.mxu0 0.0
  %1194 = vmatprep.subr.mxu0 0.0
  %1195 = vmatpush1.msra.mxu0 0.0
  %1196 = vmatprep.subr.mxu0 0.0
  %1197 = vmatpush1.msra.mxu0 0.0
  %1198 = vmatprep.subr.mxu0 0.0
  %1199 = vmatpush1.msra.mxu0 0.0
  %1200 = vmatprep.subr.mxu0 0.0
  %1201 = vmatpush1.msra.mxu0 0.0
  %1202 = vmatprep.subr.mxu0 0.0
  %1203 = vmatpush1.msra.mxu0 0.0
  %1204 = vmatprep.mubr.f32.mxu0 0.0
  %1205 = vmatmul.mubr.f32.gmra.mrb[0].mxu0 %v1063
  %v1206 = vpop.f32.mrb[0].mxu0
  %v1207 = vadd.f32 %v1139, %v1206
  %v1208 = vpop.f32.mrb[0].mxu0
  %1209 = vdwg.mxu0
  %v1210 = vld [vmem:[%s6] sm:$0xff]
  %v1211 = vld [vmem:[%s6 + $0x8] sm:$0xff]
  %v1212 = vld [vmem:[%s6 + $0x10] sm:$0xff]
  %v1213 = vld [vmem:[%s6 + $0x18] sm:$0xff]
  %v1214 = vld [vmem:[%s9] sm:$0x1]
  %1215 = vmatprep.subr.mxu0 0.0
  %1216 = vmatpush1.msra.mxu0 %v1210
  %1217 = vmatprep.subr.mxu0 0.0
  %1218 = vmatpush1.msra.mxu0 %v1211
  %1219 = vmatprep.subr.mxu0 0.0
  %1220 = vmatpush1.msra.mxu0 %v1212
  %1221 = vmatprep.subr.mxu0 0.0
  %1222 = vmatpush1.msra.mxu0 %v1213
  %1223 = vmatprep.subr.mxu0 0.0
  %1224 = vmatpush1.msra.mxu0 0.0
  %1225 = vmatprep.subr.mxu0 0.0
  %1226 = vmatpush1.msra.mxu0 0.0
  %1227 = vmatprep.subr.mxu0 0.0
  %1228 = vmatpush1.msra.mxu0 0.0
  %1229 = vmatprep.subr.mxu0 0.0
  %1230 = vmatpush1.msra.mxu0 0.0
  %1231 = vmatprep.subr.mxu0 0.0
  %1232 = vmatpush1.msra.mxu0 0.0
  %1233 = vmatprep.subr.mxu0 0.0
  %1234 = vmatpush1.msra.mxu0 0.0
  %1235 = vmatprep.subr.mxu0 0.0
  %1236 = vmatpush1.msra.mxu0 0.0
  %1237 = vmatprep.subr.mxu0 0.0
  %1238 = vmatpush1.msra.mxu0 0.0
  %1239 = vmatprep.subr.mxu0 0.0
  %1240 = vmatpush1.msra.mxu0 0.0
  %1241 = vmatprep.subr.mxu0 0.0
  %1242 = vmatpush1.msra.mxu0 0.0
  %1243 = vmatprep.subr.mxu0 0.0
  %1244 = vmatpush1.msra.mxu0 0.0
  %1245 = vmatprep.subr.mxu0 0.0
  %1246 = vmatpush1.msra.mxu0 0.0
  %1247 = vmatprep.subr.mxu0 0.0
  %1248 = vmatpush1.msra.mxu0 0.0
  %1249 = vmatprep.subr.mxu0 0.0
  %1250 = vmatpush1.msra.mxu0 0.0
  %1251 = vmatprep.subr.mxu0 0.0
  %1252 = vmatpush1.msra.mxu0 0.0
  %1253 = vmatprep.subr.mxu0 0.0
  %1254 = vmatpush1.msra.mxu0 0.0
  %1255 = vmatprep.subr.mxu0 0.0
  %1256 = vmatpush1.msra.mxu0 0.0
  %1257 = vmatprep.subr.mxu0 0.0
  %1258 = vmatpush1.msra.mxu0 0.0
  %1259 = vmatprep.subr.mxu0 0.0
  %1260 = vmatpush1.msra.mxu0 0.0
  %1261 = vmatprep.subr.mxu0 0.0
  %1262 = vmatpush1.msra.mxu0 0.0
  %1263 = vmatprep.subr.mxu0 0.0
  %1264 = vmatpush1.msra.mxu0 0.0
  %1265 = vmatprep.subr.mxu0 0.0
  %1266 = vmatpush1.msra.mxu0 0.0
  %1267 = vmatprep.subr.mxu0 0.0
  %1268 = vmatpush1.msra.mxu0 0.0
  %1269 = vmatprep.subr.mxu0 0.0
  %1270 = vmatpush1.msra.mxu0 0.0
  %1271 = vmatprep.subr.mxu0 0.0
  %1272 = vmatpush1.msra.mxu0 0.0
  %1273 = vmatprep.subr.mxu0 0.0
  %1274 = vmatpush1.msra.mxu0 0.0
  %1275 = vmatprep.subr.mxu0 0.0
  %1276 = vmatpush1.msra.mxu0 0.0
  %1277 = vmatprep.subr.mxu0 0.0
  %1278 = vmatpush1.msra.mxu0 0.0
  %1279 = vmatprep.mubr.f32.mxu0 0.0
  %1280 = vmatmul.mubr.f32.gmra.mrb[0].mxu0 %v1063
  %v1281 = vpop.f32.mrb[0].mxu0
  %v1282 = vadd.f32 %v1214, %v1281
  %v1283 = vpop.f32.mrb[0].mxu0
  %1284 = vdwg.mxu0
  %v1285 = vld [vmem:[%s0 + $0x4] sm:$0x1]
  %v1286 = vadd.f32 %v1285, %v1132
  %v1287 = vxor.u32 %v1286, 2147483648
  %v1288 = vmul.f32 %v1287, 1.442695
  %v1289 = vpow.pop %v1288
  %v1290 = vadd.f32 %v1289, 1.0
  %v1291 = vrcp.pop %v1290
  %v1292 = vmul.f32 1.0, %v1291
  %v1293 = vld [vmem:[%s1 + $0x4] sm:$0x1]
  %v1294 = vadd.f32 %v1293, %v1207
  %v1295 = vxor.u32 %v1294, 2147483648
  %v1296 = vmul.f32 %v1295, 1.442695
  %v1297 = vpow.pop %v1296
  %v1298 = vadd.f32 %v1297, 1.0
  %v1299 = vrcp.pop %v1298
  %v1300 = vmul.f32 1.0, %v1299
  %v1301 = vld [vmem:[%s2 + $0x4] sm:$0x1]
  %v1302 = vmul.f32 %v1292, %v1282
  %v1303 = vadd.f32 %v1301, %v1302
  %v1304 = vtanh.pop %v1303
  %v1305 = vsub.f32 1.0, %v1300
  %v1306 = vmul.f32 %v1305, %v1304
  %v1307 = vmul.f32 %v1300, %v1055
  %v1308 = vadd.f32 %v1306, %v1307
  %1309 = vst.msk [vmem:[%s10 + $0x4] sm:$0x1] %vm296, %v1308
  %v1310 = vld [vmem:[%s4] sm:$0xff]
  %v1311 = vld [vmem:[%s4 + $0x8] sm:$0xff]
  %v1312 = vld [vmem:[%s4 + $0x10] sm:$0xff]
  %v1313 = vld [vmem:[%s4 + $0x18] sm:$0xff]
  %v1314 = vld [vmem:[%s7] sm:$0x1]
  %v1316 = vsel %vm48, %v1308, 0
  %1318 = vmatprep.subr.mxu0 0.0
  %1319 = vmatpush1.msra.mxu0 %v1310
  %1320 = vmatprep.subr.mxu0 0.0
  %1321 = vmatpush1.msra.mxu0 %v1311
  %1322 = vmatprep.subr.mxu0 0.0
  %1323 = vmatpush1.msra.mxu0 %v1312
  %1324 = vmatprep.subr.mxu0 0.0
  %1325 = vmatpush1.msra.mxu0 %v1313
  %1326 = vmatprep.subr.mxu0 0.0
  %1327 = vmatpush1.msra.mxu0 0.0
  %1328 = vmatprep.subr.mxu0 0.0
  %1329 = vmatpush1.msra.mxu0 0.0
  %1330 = vmatprep.subr.mxu0 0.0
  %1331 = vmatpush1.msra.mxu0 0.0
  %1332 = vmatprep.subr.mxu0 0.0
  %1333 = vmatpush1.msra.mxu0 0.0
  %1334 = vmatprep.subr.mxu0 0.0
  %1335 = vmatpush1.msra.mxu0 0.0
  %1336 = vmatprep.subr.mxu0 0.0
  %1337 = vmatpush1.msra.mxu0 0.0
  %1338 = vmatprep.subr.mxu0 0.0
  %1339 = vmatpush1.msra.mxu0 0.0
  %1340 = vmatprep.subr.mxu0 0.0
  %1341 = vmatpush1.msra.mxu0 0.0
  %1342 = vmatprep.subr.mxu0 0.0
  %1343 = vmatpush1.msra.mxu0 0.0
  %1344 = vmatprep.subr.mxu0 0.0
  %1345 = vmatpush1.msra.mxu0 0.0
  %1346 = vmatprep.subr.mxu0 0.0
  %1347 = vmatpush1.msra.mxu0 0.0
  %1348 = vmatprep.subr.mxu0 0.0
  %1349 = vmatpush1.msra.mxu0 0.0
  %1350 = vmatprep.subr.mxu0 0.0
  %1351 = vmatpush1.msra.mxu0 0.0
  %1352 = vmatprep.subr.mxu0 0.0
  %1353 = vmatpush1.msra.mxu0 0.0
  %1354 = vmatprep.subr.mxu0 0.0
  %1355 = vmatpush1.msra.mxu0 0.0
  %1356 = vmatprep.subr.mxu0 0.0
  %1357 = vmatpush1.msra.mxu0 0.0
  %1358 = vmatprep.subr.mxu0 0.0
  %1359 = vmatpush1.msra.mxu0 0.0
  %1360 = vmatprep.subr.mxu0 0.0
  %1361 = vmatpush1.msra.mxu0 0.0
  %1362 = vmatprep.subr.mxu0 0.0
  %1363 = vmatpush1.msra.mxu0 0.0
  %1364 = vmatprep.subr.mxu0 0.0
  %1365 = vmatpush1.msra.mxu0 0.0
  %1366 = vmatprep.subr.mxu0 0.0
  %1367 = vmatpush1.msra.mxu0 0.0
  %1368 = vmatprep.subr.mxu0 0.0
  %1369 = vmatpush1.msra.mxu0 0.0
  %1370 = vmatprep.subr.mxu0 0.0
  %1371 = vmatpush1.msra.mxu0 0.0
  %1372 = vmatprep.subr.mxu0 0.0
  %1373 = vmatpush1.msra.mxu0 0.0
  %1374 = vmatprep.subr.mxu0 0.0
  %1375 = vmatpush1.msra.mxu0 0.0
  %1376 = vmatprep.subr.mxu0 0.0
  %1377 = vmatpush1.msra.mxu0 0.0
  %1378 = vmatprep.subr.mxu0 0.0
  %1379 = vmatpush1.msra.mxu0 0.0
  %1380 = vmatprep.subr.mxu0 0.0
  %1381 = vmatpush1.msra.mxu0 0.0
  %1382 = vmatprep.mubr.f32.mxu0 0.0
  %1383 = vmatmul.mubr.f32.gmra.mrb[0].mxu0 %v1316
  %v1384 = vpop.f32.mrb[0].mxu0
  %v1385 = vadd.f32 %v1314, %v1384
  %v1386 = vpop.f32.mrb[0].mxu0
  %1387 = vdwg.mxu0
  %v1388 = vld [vmem:[%s5] sm:$0xff]
  %v1389 = vld [vmem:[%s5 + $0x8] sm:$0xff]
  %v1390 = vld [vmem:[%s5 + $0x10] sm:$0xff]
  %v1391 = vld [vmem:[%s5 + $0x18] sm:$0xff]
  %v1392 = vld [vmem:[%s8] sm:$0x1]
  %1393 = vmatprep.subr.mxu0 0.0
  %1394 = vmatpush1.msra.mxu0 %v1388
  %1395 = vmatprep.subr.mxu0 0.0
  %1396 = vmatpush1.msra.mxu0 %v1389
  %1397 = vmatprep.subr.mxu0 0.0
  %1398 = vmatpush1.msra.mxu0 %v1390
  %1399 = vmatprep.subr.mxu0 0.0
  %1400 = vmatpush1.msra.mxu0 %v1391
  %1401 = vmatprep.subr.mxu0 0.0
  %1402 = vmatpush1.msra.mxu0 0.0
  %1403 = vmatprep.subr.mxu0 0.0
  %1404 = vmatpush1.msra.mxu0 0.0
  %1405 = vmatprep.subr.mxu0 0.0
  %1406 = vmatpush1.msra.mxu0 0.0
  %1407 = vmatprep.subr.mxu0 0.0
  %1408 = vmatpush1.msra.mxu0 0.0
  %1409 = vmatprep.subr.mxu0 0.0
  %1410 = vmatpush1.msra.mxu0 0.0
  %1411 = vmatprep.subr.mxu0 0.0
  %1412 = vmatpush1.msra.mxu0 0.0
  %1413 = vmatprep.subr.mxu0 0.0
  %1414 = vmatpush1.msra.mxu0 0.0
  %1415 = vmatprep.subr.mxu0 0.0
  %1416 = vmatpush1.msra.mxu0 0.0
  %1417 = vmatprep.subr.mxu0 0.0
  %1418 = vmatpush1.msra.mxu0 0.0
  %1419 = vmatprep.subr.mxu0 0.0
  %1420 = vmatpush1.msra.mxu0 0.0
  %1421 = vmatprep.subr.mxu0 0.0
  %1422 = vmatpush1.msra.mxu0 0.0
  %1423 = vmatprep.subr.mxu0 0.0
  %1424 = vmatpush1.msra.mxu0 0.0
  %1425 = vmatprep.subr.mxu0 0.0
  %1426 = vmatpush1.msra.mxu0 0.0
  %1427 = vmatprep.subr.mxu0 0.0
  %1428 = vmatpush1.msra.mxu0 0.0
  %1429 = vmatprep.subr.mxu0 0.0
  %1430 = vmatpush1.msra.mxu0 0.0
  %1431 = vmatprep.subr.mxu0 0.0
  %1432 = vmatpush1.msra.mxu0 0.0
  %1433 = vmatprep.subr.mxu0 0.0
  %1434 = vmatpush1.msra.mxu0 0.0
  %1435 = vmatprep.subr.mxu0 0.0
  %1436 = vmatpush1.msra.mxu0 0.0
  %1437 = vmatprep.subr.mxu0 0.0
  %1438 = vmatpush1.msra.mxu0 0.0
  %1439 = vmatprep.subr.mxu0 0.0
  %1440 = vmatpush1.msra.mxu0 0.0
  %1441 = vmatprep.subr.mxu0 0.0
  %1442 = vmatpush1.msra.mxu0 0.0
  %1443 = vmatprep.subr.mxu0 0.0
  %1444 = vmatpush1.msra.mxu0 0.0
  %1445 = vmatprep.subr.mxu0 0.0
  %1446 = vmatpush1.msra.mxu0 0.0
  %1447 = vmatprep.subr.mxu0 0.0
  %1448 = vmatpush1.msra.mxu0 0.0
  %1449 = vmatprep.subr.mxu0 0.0
  %1450 = vmatpush1.msra.mxu0 0.0
  %1451 = vmatprep.subr.mxu0 0.0
  %1452 = vmatpush1.msra.mxu0 0.0
  %1453 = vmatprep.subr.mxu0 0.0
  %1454 = vmatpush1.msra.mxu0 0.0
  %1455 = vmatprep.subr.mxu0 0.0
  %1456 = vmatpush1.msra.mxu0 0.0
  %1457 = vmatprep.mubr.f32.mxu0 0.0
  %1458 = vmatmul.mubr.f32.gmra.mrb[0].mxu0 %v1316
  %v1459 = vpop.f32.mrb[0].mxu0
  %v1460 = vadd.f32 %v1392, %v1459
  %v1461 = vpop.f32.mrb[0].mxu0
  %1462 = vdwg.mxu0
  %v1463 = vld [vmem:[%s6] sm:$0xff]
  %v1464 = vld [vmem:[%s6 + $0x8] sm:$0xff]
  %v1465 = vld [vmem:[%s6 + $0x10] sm:$0xff]
  %v1466 = vld [vmem:[%s6 + $0x18] sm:$0xff]
  %v1467 = vld [vmem:[%s9] sm:$0x1]
  %1468 = vmatprep.subr.mxu0 0.0
  %1469 = vmatpush1.msra.mxu0 %v1463
  %1470 = vmatprep.subr.mxu0 0.0
  %1471 = vmatpush1.msra.mxu0 %v1464
  %1472 = vmatprep.subr.mxu0 0.0
  %1473 = vmatpush1.msra.mxu0 %v1465
  %1474 = vmatprep.subr.mxu0 0.0
  %1475 = vmatpush1.msra.mxu0 %v1466
  %1476 = vmatprep.subr.mxu0 0.0
  %1477 = vmatpush1.msra.mxu0 0.0
  %1478 = vmatprep.subr.mxu0 0.0
  %1479 = vmatpush1.msra.mxu0 0.0
  %1480 = vmatprep.subr.mxu0 0.0
  %1481 = vmatpush1.msra.mxu0 0.0
  %1482 = vmatprep.subr.mxu0 0.0
  %1483 = vmatpush1.msra.mxu0 0.0
  %1484 = vmatprep.subr.mxu0 0.0
  %1485 = vmatpush1.msra.mxu0 0.0
  %1486 = vmatprep.subr.mxu0 0.0
  %1487 = vmatpush1.msra.mxu0 0.0
  %1488 = vmatprep.subr.mxu0 0.0
  %1489 = vmatpush1.msra.mxu0 0.0
  %1490 = vmatprep.subr.mxu0 0.0
  %1491 = vmatpush1.msra.mxu0 0.0
  %1492 = vmatprep.subr.mxu0 0.0
  %1493 = vmatpush1.msra.mxu0 0.0
  %1494 = vmatprep.subr.mxu0 0.0
  %1495 = vmatpush1.msra.mxu0 0.0
  %1496 = vmatprep.subr.mxu0 0.0
  %1497 = vmatpush1.msra.mxu0 0.0
  %1498 = vmatprep.subr.mxu0 0.0
  %1499 = vmatpush1.msra.mxu0 0.0
  %1500 = vmatprep.subr.mxu0 0.0
  %1501 = vmatpush1.msra.mxu0 0.0
  %1502 = vmatprep.subr.mxu0 0.0
  %1503 = vmatpush1.msra.mxu0 0.0
  %1504 = vmatprep.subr.mxu0 0.0
  %1505 = vmatpush1.msra.mxu0 0.0
  %1506 = vmatprep.subr.mxu0 0.0
  %1507 = vmatpush1.msra.mxu0 0.0
  %1508 = vmatprep.subr.mxu0 0.0
  %1509 = vmatpush1.msra.mxu0 0.0
  %1510 = vmatprep.subr.mxu0 0.0
  %1511 = vmatpush1.msra.mxu0 0.0
  %1512 = vmatprep.subr.mxu0 0.0
  %1513 = vmatpush1.msra.mxu0 0.0
  %1514 = vmatprep.subr.mxu0 0.0
  %1515 = vmatpush1.msra.mxu0 0.0
  %1516 = vmatprep.subr.mxu0 0.0
  %1517 = vmatpush1.msra.mxu0 0.0
  %1518 = vmatprep.subr.mxu0 0.0
  %1519 = vmatpush1.msra.mxu0 0.0
  %1520 = vmatprep.subr.mxu0 0.0
  %1521 = vmatpush1.msra.mxu0 0.0
  %1522 = vmatprep.subr.mxu0 0.0
  %1523 = vmatpush1.msra.mxu0 0.0
  %1524 = vmatprep.subr.mxu0 0.0
  %1525 = vmatpush1.msra.mxu0 0.0
  %1526 = vmatprep.subr.mxu0 0.0
  %1527 = vmatpush1.msra.mxu0 0.0
  %1528 = vmatprep.subr.mxu0 0.0
  %1529 = vmatpush1.msra.mxu0 0.0
  %1530 = vmatprep.subr.mxu0 0.0
  %1531 = vmatpush1.msra.mxu0 0.0
  %1532 = vmatprep.mubr.f32.mxu0 0.0
  %1533 = vmatmul.mubr.f32.gmra.mrb[0].mxu0 %v1316
  %v1534 = vpop.f32.mrb[0].mxu0
  %v1535 = vadd.f32 %v1467, %v1534
  %v1536 = vpop.f32.mrb[0].mxu0
  %1537 = vdwg.mxu0
  %v1538 = vld [vmem:[%s0 + $0x5] sm:$0x1]
  %v1539 = vadd.f32 %v1538, %v1385
  %v1540 = vxor.u32 %v1539, 2147483648
  %v1541 = vmul.f32 %v1540, 1.442695
  %v1542 = vpow.pop %v1541
  %v1543 = vadd.f32 %v1542, 1.0
  %v1544 = vrcp.pop %v1543
  %v1545 = vmul.f32 1.0, %v1544
  %v1546 = vld [vmem:[%s1 + $0x5] sm:$0x1]
  %v1547 = vadd.f32 %v1546, %v1460
  %v1548 = vxor.u32 %v1547, 2147483648
  %v1549 = vmul.f32 %v1548, 1.442695
  %v1550 = vpow.pop %v1549
  %v1551 = vadd.f32 %v1550, 1.0
  %v1552 = vrcp.pop %v1551
  %v1553 = vmul.f32 1.0, %v1552
  %v1554 = vld [vmem:[%s2 + $0x5] sm:$0x1]
  %v1555 = vmul.f32 %v1545, %v1535
  %v1556 = vadd.f32 %v1554, %v1555
  %v1557 = vtanh.pop %v1556
  %v1558 = vsub.f32 1.0, %v1553
  %v1559 = vmul.f32 %v1558, %v1557
  %v1560 = vmul.f32 %v1553, %v1308
  %v1561 = vadd.f32 %v1559, %v1560
  %1562 = vst.msk [vmem:[%s10 + $0x5] sm:$0x1] %vm296, %v1561
  %v1563 = vld [vmem:[%s4] sm:$0xff]
  %v1564 = vld [vmem:[%s4 + $0x8] sm:$0xff]
  %v1565 = vld [vmem:[%s4 + $0x10] sm:$0xff]
  %v1566 = vld [vmem:[%s4 + $0x18] sm:$0xff]
  %v1567 = vld [vmem:[%s7] sm:$0x1]
  %v1569 = vsel %vm48, %v1561, 0
  %1571 = vmatprep.subr.mxu0 0.0
  %1572 = vmatpush1.msra.mxu0 %v1563
  %1573 = vmatprep.subr.mxu0 0.0
  %1574 = vmatpush1.msra.mxu0 %v1564
  %1575 = vmatprep.subr.mxu0 0.0
  %1576 = vmatpush1.msra.mxu0 %v1565
  %1577 = vmatprep.subr.mxu0 0.0
  %1578 = vmatpush1.msra.mxu0 %v1566
  %1579 = vmatprep.subr.mxu0 0.0
  %1580 = vmatpush1.msra.mxu0 0.0
  %1581 = vmatprep.subr.mxu0 0.0
  %1582 = vmatpush1.msra.mxu0 0.0
  %1583 = vmatprep.subr.mxu0 0.0
  %1584 = vmatpush1.msra.mxu0 0.0
  %1585 = vmatprep.subr.mxu0 0.0
  %1586 = vmatpush1.msra.mxu0 0.0
  %1587 = vmatprep.subr.mxu0 0.0
  %1588 = vmatpush1.msra.mxu0 0.0
  %1589 = vmatprep.subr.mxu0 0.0
  %1590 = vmatpush1.msra.mxu0 0.0
  %1591 = vmatprep.subr.mxu0 0.0
  %1592 = vmatpush1.msra.mxu0 0.0
  %1593 = vmatprep.subr.mxu0 0.0
  %1594 = vmatpush1.msra.mxu0 0.0
  %1595 = vmatprep.subr.mxu0 0.0
  %1596 = vmatpush1.msra.mxu0 0.0
  %1597 = vmatprep.subr.mxu0 0.0
  %1598 = vmatpush1.msra.mxu0 0.0
  %1599 = vmatprep.subr.mxu0 0.0
  %1600 = vmatpush1.msra.mxu0 0.0
  %1601 = vmatprep.subr.mxu0 0.0
  %1602 = vmatpush1.msra.mxu0 0.0
  %1603 = vmatprep.subr.mxu0 0.0
  %1604 = vmatpush1.msra.mxu0 0.0
  %1605 = vmatprep.subr.mxu0 0.0
  %1606 = vmatpush1.msra.mxu0 0.0
  %1607 = vmatprep.subr.mxu0 0.0
  %1608 = vmatpush1.msra.mxu0 0.0
  %1609 = vmatprep.subr.mxu0 0.0
  %1610 = vmatpush1.msra.mxu0 0.0
  %1611 = vmatprep.subr.mxu0 0.0
  %1612 = vmatpush1.msra.mxu0 0.0
  %1613 = vmatprep.subr.mxu0 0.0
  %1614 = vmatpush1.msra.mxu0 0.0
  %1615 = vmatprep.subr.mxu0 0.0
  %1616 = vmatpush1.msra.mxu0 0.0
  %1617 = vmatprep.subr.mxu0 0.0
  %1618 = vmatpush1.msra.mxu0 0.0
  %1619 = vmatprep.subr.mxu0 0.0
  %1620 = vmatpush1.msra.mxu0 0.0
  %1621 = vmatprep.subr.mxu0 0.0
  %1622 = vmatpush1.msra.mxu0 0.0
  %1623 = vmatprep.subr.mxu0 0.0
  %1624 = vmatpush1.msra.mxu0 0.0
  %1625 = vmatprep.subr.mxu0 0.0
  %1626 = vmatpush1.msra.mxu0 0.0
  %1627 = vmatprep.subr.mxu0 0.0
  %1628 = vmatpush1.msra.mxu0 0.0
  %1629 = vmatprep.subr.mxu0 0.0
  %1630 = vmatpush1.msra.mxu0 0.0
  %1631 = vmatprep.subr.mxu0 0.0
  %1632 = vmatpush1.msra.mxu0 0.0
  %1633 = vmatprep.subr.mxu0 0.0
  %1634 = vmatpush1.msra.mxu0 0.0
  %1635 = vmatprep.mubr.f32.mxu0 0.0
  %1636 = vmatmul.mubr.f32.gmra.mrb[0].mxu0 %v1569
  %v1637 = vpop.f32.mrb[0].mxu0
  %v1638 = vadd.f32 %v1567, %v1637
  %v1639 = vpop.f32.mrb[0].mxu0
  %1640 = vdwg.mxu0
  %v1641 = vld [vmem:[%s5] sm:$0xff]
  %v1642 = vld [vmem:[%s5 + $0x8] sm:$0xff]
  %v1643 = vld [vmem:[%s5 + $0x10] sm:$0xff]
  %v1644 = vld [vmem:[%s5 + $0x18] sm:$0xff]
  %v1645 = vld [vmem:[%s8] sm:$0x1]
  %1646 = vmatprep.subr.mxu0 0.0
  %1647 = vmatpush1.msra.mxu0 %v1641
  %1648 = vmatprep.subr.mxu0 0.0
  %1649 = vmatpush1.msra.mxu0 %v1642
  %1650 = vmatprep.subr.mxu0 0.0
  %1651 = vmatpush1.msra.mxu0 %v1643
  %1652 = vmatprep.subr.mxu0 0.0
  %1653 = vmatpush1.msra.mxu0 %v1644
  %1654 = vmatprep.subr.mxu0 0.0
  %1655 = vmatpush1.msra.mxu0 0.0
  %1656 = vmatprep.subr.mxu0 0.0
  %1657 = vmatpush1.msra.mxu0 0.0
  %1658 = vmatprep.subr.mxu0 0.0
  %1659 = vmatpush1.msra.mxu0 0.0
  %1660 = vmatprep.subr.mxu0 0.0
  %1661 = vmatpush1.msra.mxu0 0.0
  %1662 = vmatprep.subr.mxu0 0.0
  %1663 = vmatpush1.msra.mxu0 0.0
  %1664 = vmatprep.subr.mxu0 0.0
  %1665 = vmatpush1.msra.mxu0 0.0
  %1666 = vmatprep.subr.mxu0 0.0
  %1667 = vmatpush1.msra.mxu0 0.0
  %1668 = vmatprep.subr.mxu0 0.0
  %1669 = vmatpush1.msra.mxu0 0.0
  %1670 = vmatprep.subr.mxu0 0.0
  %1671 = vmatpush1.msra.mxu0 0.0
  %1672 = vmatprep.subr.mxu0 0.0
  %1673 = vmatpush1.msra.mxu0 0.0
  %1674 = vmatprep.subr.mxu0 0.0
  %1675 = vmatpush1.msra.mxu0 0.0
  %1676 = vmatprep.subr.mxu0 0.0
  %1677 = vmatpush1.msra.mxu0 0.0
  %1678 = vmatprep.subr.mxu0 0.0
  %1679 = vmatpush1.msra.mxu0 0.0
  %1680 = vmatprep.subr.mxu0 0.0
  %1681 = vmatpush1.msra.mxu0 0.0
  %1682 = vmatprep.subr.mxu0 0.0
  %1683 = vmatpush1.msra.mxu0 0.0
  %1684 = vmatprep.subr.mxu0 0.0
  %1685 = vmatpush1.msra.mxu0 0.0
  %1686 = vmatprep.subr.mxu0 0.0
  %1687 = vmatpush1.msra.mxu0 0.0
  %1688 = vmatprep.subr.mxu0 0.0
  %1689 = vmatpush1.msra.mxu0 0.0
  %1690 = vmatprep.subr.mxu0 0.0
  %1691 = vmatpush1.msra.mxu0 0.0
  %1692 = vmatprep.subr.mxu0 0.0
  %1693 = vmatpush1.msra.mxu0 0.0
  %1694 = vmatprep.subr.mxu0 0.0
  %1695 = vmatpush1.msra.mxu0 0.0
  %1696 = vmatprep.subr.mxu0 0.0
  %1697 = vmatpush1.msra.mxu0 0.0
  %1698 = vmatprep.subr.mxu0 0.0
  %1699 = vmatpush1.msra.mxu0 0.0
  %1700 = vmatprep.subr.mxu0 0.0
  %1701 = vmatpush1.msra.mxu0 0.0
  %1702 = vmatprep.subr.mxu0 0.0
  %1703 = vmatpush1.msra.mxu0 0.0
  %1704 = vmatprep.subr.mxu0 0.0
  %1705 = vmatpush1.msra.mxu0 0.0
  %1706 = vmatprep.subr.mxu0 0.0
  %1707 = vmatpush1.msra.mxu0 0.0
  %1708 = vmatprep.subr.mxu0 0.0
  %1709 = vmatpush1.msra.mxu0 0.0
  %1710 = vmatprep.mubr.f32.mxu0 0.0
  %1711 = vmatmul.mubr.f32.gmra.mrb[0].mxu0 %v1569
  %v1712 = vpop.f32.mrb[0].mxu0
  %v1713 = vadd.f32 %v1645, %v1712
  %v1714 = vpop.f32.mrb[0].mxu0
  %1715 = vdwg.mxu0
  %v1716 = vld [vmem:[%s6] sm:$0xff]
  %v1717 = vld [vmem:[%s6 + $0x8] sm:$0xff]
  %v1718 = vld [vmem:[%s6 + $0x10] sm:$0xff]
  %v1719 = vld [vmem:[%s6 + $0x18] sm:$0xff]
  %v1720 = vld [vmem:[%s9] sm:$0x1]
  %1721 = vmatprep.subr.mxu0 0.0
  %1722 = vmatpush1.msra.mxu0 %v1716
  %1723 = vmatprep.subr.mxu0 0.0
  %1724 = vmatpush1.msra.mxu0 %v1717
  %1725 = vmatprep.subr.mxu0 0.0
  %1726 = vmatpush1.msra.mxu0 %v1718
  %1727 = vmatprep.subr.mxu0 0.0
  %1728 = vmatpush1.msra.mxu0 %v1719
  %1729 = vmatprep.subr.mxu0 0.0
  %1730 = vmatpush1.msra.mxu0 0.0
  %1731 = vmatprep.subr.mxu0 0.0
  %1732 = vmatpush1.msra.mxu0 0.0
  %1733 = vmatprep.subr.mxu0 0.0
  %1734 = vmatpush1.msra.mxu0 0.0
  %1735 = vmatprep.subr.mxu0 0.0
  %1736 = vmatpush1.msra.mxu0 0.0
  %1737 = vmatprep.subr.mxu0 0.0
  %1738 = vmatpush1.msra.mxu0 0.0
  %1739 = vmatprep.subr.mxu0 0.0
  %1740 = vmatpush1.msra.mxu0 0.0
  %1741 = vmatprep.subr.mxu0 0.0
  %1742 = vmatpush1.msra.mxu0 0.0
  %1743 = vmatprep.subr.mxu0 0.0
  %1744 = vmatpush1.msra.mxu0 0.0
  %1745 = vmatprep.subr.mxu0 0.0
  %1746 = vmatpush1.msra.mxu0 0.0
  %1747 = vmatprep.subr.mxu0 0.0
  %1748 = vmatpush1.msra.mxu0 0.0
  %1749 = vmatprep.subr.mxu0 0.0
  %1750 = vmatpush1.msra.mxu0 0.0
  %1751 = vmatprep.subr.mxu0 0.0
  %1752 = vmatpush1.msra.mxu0 0.0
  %1753 = vmatprep.subr.mxu0 0.0
  %1754 = vmatpush1.msra.mxu0 0.0
  %1755 = vmatprep.subr.mxu0 0.0
  %1756 = vmatpush1.msra.mxu0 0.0
  %1757 = vmatprep.subr.mxu0 0.0
  %1758 = vmatpush1.msra.mxu0 0.0
  %1759 = vmatprep.subr.mxu0 0.0
  %1760 = vmatpush1.msra.mxu0 0.0
  %1761 = vmatprep.subr.mxu0 0.0
  %1762 = vmatpush1.msra.mxu0 0.0
  %1763 = vmatprep.subr.mxu0 0.0
  %1764 = vmatpush1.msra.mxu0 0.0
  %1765 = vmatprep.subr.mxu0 0.0
  %1766 = vmatpush1.msra.mxu0 0.0
  %1767 = vmatprep.subr.mxu0 0.0
  %1768 = vmatpush1.msra.mxu0 0.0
  %1769 = vmatprep.subr.mxu0 0.0
  %1770 = vmatpush1.msra.mxu0 0.0
  %1771 = vmatprep.subr.mxu0 0.0
  %1772 = vmatpush1.msra.mxu0 0.0
  %1773 = vmatprep.subr.mxu0 0.0
  %1774 = vmatpush1.msra.mxu0 0.0
  %1775 = vmatprep.subr.mxu0 0.0
  %1776 = vmatpush1.msra.mxu0 0.0
  %1777 = vmatprep.subr.mxu0 0.0
  %1778 = vmatpush1.msra.mxu0 0.0
  %1779 = vmatprep.subr.mxu0 0.0
  %1780 = vmatpush1.msra.mxu0 0.0
  %1781 = vmatprep.subr.mxu0 0.0
  %1782 = vmatpush1.msra.mxu0 0.0
  %1783 = vmatprep.subr.mxu0 0.0
  %1784 = vmatpush1.msra.mxu0 0.0
  %1785 = vmatprep.mubr.f32.mxu0 0.0
  %1786 = vmatmul.mubr.f32.gmra.mrb[0].mxu0 %v1569
  %v1787 = vpop.f32.mrb[0].mxu0
  %v1788 = vadd.f32 %v1720, %v1787
  %v1789 = vpop.f32.mrb[0].mxu0
  %1790 = vdwg.mxu0
  %v1791 = vld [vmem:[%s0 + $0x6] sm:$0x1]
  %v1792 = vadd.f32 %v1791, %v1638
  %v1793 = vxor.u32 %v1792, 2147483648
  %v1794 = vmul.f32 %v1793, 1.442695
  %v1795 = vpow.pop %v1794
  %v1796 = vadd.f32 %v1795, 1.0
  %v1797 = vrcp.pop %v1796
  %v1798 = vmul.f32 1.0, %v1797
  %v1799 = vld [vmem:[%s1 + $0x6] sm:$0x1]
  %v1800 = vadd.f32 %v1799, %v1713
  %v1801 = vxor.u32 %v1800, 2147483648
  %v1802 = vmul.f32 %v1801, 1.442695
  %v1803 = vpow.pop %v1802
  %v1804 = vadd.f32 %v1803, 1.0
  %v1805 = vrcp.pop %v1804
  %v1806 = vmul.f32 1.0, %v1805
  %v1807 = vld [vmem:[%s2 + $0x6] sm:$0x1]
  %v1808 = vmul.f32 %v1798, %v1788
  %v1809 = vadd.f32 %v1807, %v1808
  %v1810 = vtanh.pop %v1809
  %v1811 = vsub.f32 1.0, %v1806
  %v1812 = vmul.f32 %v1811, %v1810
  %v1813 = vmul.f32 %v1806, %v1561
  %v1814 = vadd.f32 %v1812, %v1813
  %1815 = vst.msk [vmem:[%s10 + $0x6] sm:$0x1] %vm296, %v1814
  %v1816 = vld [vmem:[%s4] sm:$0xff]
  %v1817 = vld [vmem:[%s4 + $0x8] sm:$0xff]
  %v1818 = vld [vmem:[%s4 + $0x10] sm:$0xff]
  %v1819 = vld [vmem:[%s4 + $0x18] sm:$0xff]
  %v1820 = vld [vmem:[%s7] sm:$0x1]
  %v1822 = vsel %vm48, %v1814, 0
  %1824 = vmatprep.subr.mxu0 0.0
  %1825 = vmatpush1.msra.mxu0 %v1816
  %1826 = vmatprep.subr.mxu0 0.0
  %1827 = vmatpush1.msra.mxu0 %v1817
  %1828 = vmatprep.subr.mxu0 0.0
  %1829 = vmatpush1.msra.mxu0 %v1818
  %1830 = vmatprep.subr.mxu0 0.0
  %1831 = vmatpush1.msra.mxu0 %v1819
  %1832 = vmatprep.subr.mxu0 0.0
  %1833 = vmatpush1.msra.mxu0 0.0
  %1834 = vmatprep.subr.mxu0 0.0
  %1835 = vmatpush1.msra.mxu0 0.0
  %1836 = vmatprep.subr.mxu0 0.0
  %1837 = vmatpush1.msra.mxu0 0.0
  %1838 = vmatprep.subr.mxu0 0.0
  %1839 = vmatpush1.msra.mxu0 0.0
  %1840 = vmatprep.subr.mxu0 0.0
  %1841 = vmatpush1.msra.mxu0 0.0
  %1842 = vmatprep.subr.mxu0 0.0
  %1843 = vmatpush1.msra.mxu0 0.0
  %1844 = vmatprep.subr.mxu0 0.0
  %1845 = vmatpush1.msra.mxu0 0.0
  %1846 = vmatprep.subr.mxu0 0.0
  %1847 = vmatpush1.msra.mxu0 0.0
  %1848 = vmatprep.subr.mxu0 0.0
  %1849 = vmatpush1.msra.mxu0 0.0
  %1850 = vmatprep.subr.mxu0 0.0
  %1851 = vmatpush1.msra.mxu0 0.0
  %1852 = vmatprep.subr.mxu0 0.0
  %1853 = vmatpush1.msra.mxu0 0.0
  %1854 = vmatprep.subr.mxu0 0.0
  %1855 = vmatpush1.msra.mxu0 0.0
  %1856 = vmatprep.subr.mxu0 0.0
  %1857 = vmatpush1.msra.mxu0 0.0
  %1858 = vmatprep.subr.mxu0 0.0
  %1859 = vmatpush1.msra.mxu0 0.0
  %1860 = vmatprep.subr.mxu0 0.0
  %1861 = vmatpush1.msra.mxu0 0.0
  %1862 = vmatprep.subr.mxu0 0.0
  %1863 = vmatpush1.msra.mxu0 0.0
  %1864 = vmatprep.subr.mxu0 0.0
  %1865 = vmatpush1.msra.mxu0 0.0
  %1866 = vmatprep.subr.mxu0 0.0
  %1867 = vmatpush1.msra.mxu0 0.0
  %1868 = vmatprep.subr.mxu0 0.0
  %1869 = vmatpush1.msra.mxu0 0.0
  %1870 = vmatprep.subr.mxu0 0.0
  %1871 = vmatpush1.msra.mxu0 0.0
  %1872 = vmatprep.subr.mxu0 0.0
  %1873 = vmatpush1.msra.mxu0 0.0
  %1874 = vmatprep.subr.mxu0 0.0
  %1875 = vmatpush1.msra.mxu0 0.0
  %1876 = vmatprep.subr.mxu0 0.0
  %1877 = vmatpush1.msra.mxu0 0.0
  %1878 = vmatprep.subr.mxu0 0.0
  %1879 = vmatpush1.msra.mxu0 0.0
  %1880 = vmatprep.subr.mxu0 0.0
  %1881 = vmatpush1.msra.mxu0 0.0
  %1882 = vmatprep.subr.mxu0 0.0
  %1883 = vmatpush1.msra.mxu0 0.0
  %1884 = vmatprep.subr.mxu0 0.0
  %1885 = vmatpush1.msra.mxu0 0.0
  %1886 = vmatprep.subr.mxu0 0.0
  %1887 = vmatpush1.msra.mxu0 0.0
  %1888 = vmatprep.mubr.f32.mxu0 0.0
  %1889 = vmatmul.mubr.f32.gmra.mrb[0].mxu0 %v1822
  %v1890 = vpop.f32.mrb[0].mxu0
  %v1891 = vadd.f32 %v1820, %v1890
  %v1892 = vpop.f32.mrb[0].mxu0
  %1893 = vdwg.mxu0
  %v1894 = vld [vmem:[%s5] sm:$0xff]
  %v1895 = vld [vmem:[%s5 + $0x8] sm:$0xff]
  %v1896 = vld [vmem:[%s5 + $0x10] sm:$0xff]
  %v1897 = vld [vmem:[%s5 + $0x18] sm:$0xff]
  %v1898 = vld [vmem:[%s8] sm:$0x1]
  %1899 = vmatprep.subr.mxu0 0.0
  %1900 = vmatpush1.msra.mxu0 %v1894
  %1901 = vmatprep.subr.mxu0 0.0
  %1902 = vmatpush1.msra.mxu0 %v1895
  %1903 = vmatprep.subr.mxu0 0.0
  %1904 = vmatpush1.msra.mxu0 %v1896
  %1905 = vmatprep.subr.mxu0 0.0
  %1906 = vmatpush1.msra.mxu0 %v1897
  %1907 = vmatprep.subr.mxu0 0.0
  %1908 = vmatpush1.msra.mxu0 0.0
  %1909 = vmatprep.subr.mxu0 0.0
  %1910 = vmatpush1.msra.mxu0 0.0
  %1911 = vmatprep.subr.mxu0 0.0
  %1912 = vmatpush1.msra.mxu0 0.0
  %1913 = vmatprep.subr.mxu0 0.0
  %1914 = vmatpush1.msra.mxu0 0.0
  %1915 = vmatprep.subr.mxu0 0.0
  %1916 = vmatpush1.msra.mxu0 0.0
  %1917 = vmatprep.subr.mxu0 0.0
  %1918 = vmatpush1.msra.mxu0 0.0
  %1919 = vmatprep.subr.mxu0 0.0
  %1920 = vmatpush1.msra.mxu0 0.0
  %1921 = vmatprep.subr.mxu0 0.0
  %1922 = vmatpush1.msra.mxu0 0.0
  %1923 = vmatprep.subr.mxu0 0.0
  %1924 = vmatpush1.msra.mxu0 0.0
  %1925 = vmatprep.subr.mxu0 0.0
  %1926 = vmatpush1.msra.mxu0 0.0
  %1927 = vmatprep.subr.mxu0 0.0
  %1928 = vmatpush1.msra.mxu0 0.0
  %1929 = vmatprep.subr.mxu0 0.0
  %1930 = vmatpush1.msra.mxu0 0.0
  %1931 = vmatprep.subr.mxu0 0.0
  %1932 = vmatpush1.msra.mxu0 0.0
  %1933 = vmatprep.subr.mxu0 0.0
  %1934 = vmatpush1.msra.mxu0 0.0
  %1935 = vmatprep.subr.mxu0 0.0
  %1936 = vmatpush1.msra.mxu0 0.0
  %1937 = vmatprep.subr.mxu0 0.0
  %1938 = vmatpush1.msra.mxu0 0.0
  %1939 = vmatprep.subr.mxu0 0.0
  %1940 = vmatpush1.msra.mxu0 0.0
  %1941 = vmatprep.subr.mxu0 0.0
  %1942 = vmatpush1.msra.mxu0 0.0
  %1943 = vmatprep.subr.mxu0 0.0
  %1944 = vmatpush1.msra.mxu0 0.0
  %1945 = vmatprep.subr.mxu0 0.0
  %1946 = vmatpush1.msra.mxu0 0.0
  %1947 = vmatprep.subr.mxu0 0.0
  %1948 = vmatpush1.msra.mxu0 0.0
  %1949 = vmatprep.subr.mxu0 0.0
  %1950 = vmatpush1.msra.mxu0 0.0
  %1951 = vmatprep.subr.mxu0 0.0
  %1952 = vmatpush1.msra.mxu0 0.0
  %1953 = vmatprep.subr.mxu0 0.0
  %1954 = vmatpush1.msra.mxu0 0.0
  %1955 = vmatprep.subr.mxu0 0.0
  %1956 = vmatpush1.msra.mxu0 0.0
  %1957 = vmatprep.subr.mxu0 0.0
  %1958 = vmatpush1.msra.mxu0 0.0
  %1959 = vmatprep.subr.mxu0 0.0
  %1960 = vmatpush1.msra.mxu0 0.0
  %1961 = vmatprep.subr.mxu0 0.0
  %1962 = vmatpush1.msra.mxu0 0.0
  %1963 = vmatprep.mubr.f32.mxu0 0.0
  %1964 = vmatmul.mubr.f32.gmra.mrb[0].mxu0 %v1822
  %v1965 = vpop.f32.mrb[0].mxu0
  %v1966 = vadd.f32 %v1898, %v1965
  %v1967 = vpop.f32.mrb[0].mxu0
  %1968 = vdwg.mxu0
  %v1969 = vld [vmem:[%s6] sm:$0xff]
  %v1970 = vld [vmem:[%s6 + $0x8] sm:$0xff]
  %v1971 = vld [vmem:[%s6 + $0x10] sm:$0xff]
  %v1972 = vld [vmem:[%s6 + $0x18] sm:$0xff]
  %v1973 = vld [vmem:[%s9] sm:$0x1]
  %1974 = vmatprep.subr.mxu0 0.0
  %1975 = vmatpush1.msra.mxu0 %v1969
  %1976 = vmatprep.subr.mxu0 0.0
  %1977 = vmatpush1.msra.mxu0 %v1970
  %1978 = vmatprep.subr.mxu0 0.0
  %1979 = vmatpush1.msra.mxu0 %v1971
  %1980 = vmatprep.subr.mxu0 0.0
  %1981 = vmatpush1.msra.mxu0 %v1972
  %1982 = vmatprep.subr.mxu0 0.0
  %1983 = vmatpush1.msra.mxu0 0.0
  %1984 = vmatprep.subr.mxu0 0.0
  %1985 = vmatpush1.msra.mxu0 0.0
  %1986 = vmatprep.subr.mxu0 0.0
  %1987 = vmatpush1.msra.mxu0 0.0
  %1988 = vmatprep.subr.mxu0 0.0
  %1989 = vmatpush1.msra.mxu0 0.0
  %1990 = vmatprep.subr.mxu0 0.0
  %1991 = vmatpush1.msra.mxu0 0.0
  %1992 = vmatprep.subr.mxu0 0.0
  %1993 = vmatpush1.msra.mxu0 0.0
  %1994 = vmatprep.subr.mxu0 0.0
  %1995 = vmatpush1.msra.mxu0 0.0
  %1996 = vmatprep.subr.mxu0 0.0
  %1997 = vmatpush1.msra.mxu0 0.0
  %1998 = vmatprep.subr.mxu0 0.0
  %1999 = vmatpush1.msra.mxu0 0.0
  %2000 = vmatprep.subr.mxu0 0.0
  %2001 = vmatpush1.msra.mxu0 0.0
  %2002 = vmatprep.subr.mxu0 0.0
  %2003 = vmatpush1.msra.mxu0 0.0
  %2004 = vmatprep.subr.mxu0 0.0
  %2005 = vmatpush1.msra.mxu0 0.0
  %2006 = vmatprep.subr.mxu0 0.0
  %2007 = vmatpush1.msra.mxu0 0.0
  %2008 = vmatprep.subr.mxu0 0.0
  %2009 = vmatpush1.msra.mxu0 0.0
  %2010 = vmatprep.subr.mxu0 0.0
  %2011 = vmatpush1.msra.mxu0 0.0
  %2012 = vmatprep.subr.mxu0 0.0
  %2013 = vmatpush1.msra.mxu0 0.0
  %2014 = vmatprep.subr.mxu0 0.0
  %2015 = vmatpush1.msra.mxu0 0.0
  %2016 = vmatprep.subr.mxu0 0.0
  %2017 = vmatpush1.msra.mxu0 0.0
  %2018 = vmatprep.subr.mxu0 0.0
  %2019 = vmatpush1.msra.mxu0 0.0
  %2020 = vmatprep.subr.mxu0 0.0
  %2021 = vmatpush1.msra.mxu0 0.0
  %2022 = vmatprep.subr.mxu0 0.0
  %2023 = vmatpush1.msra.mxu0 0.0
  %2024 = vmatprep.subr.mxu0 0.0
  %2025 = vmatpush1.msra.mxu0 0.0
  %2026 = vmatprep.subr.mxu0 0.0
  %2027 = vmatpush1.msra.mxu0 0.0
  %2028 = vmatprep.subr.mxu0 0.0
  %2029 = vmatpush1.msra.mxu0 0.0
  %2030 = vmatprep.subr.mxu0 0.0
  %2031 = vmatpush1.msra.mxu0 0.0
  %2032 = vmatprep.subr.mxu0 0.0
  %2033 = vmatpush1.msra.mxu0 0.0
  %2034 = vmatprep.subr.mxu0 0.0
  %2035 = vmatpush1.msra.mxu0 0.0
  %2036 = vmatprep.subr.mxu0 0.0
  %2037 = vmatpush1.msra.mxu0 0.0
  %2038 = vmatprep.mubr.f32.mxu0 0.0
  %2039 = vmatmul.mubr.f32.gmra.mrb[0].mxu0 %v1822
  %v2040 = vpop.f32.mrb[0].mxu0
  %v2041 = vadd.f32 %v1973, %v2040
  %v2042 = vpop.f32.mrb[0].mxu0
  %2043 = vdwg.mxu0
  %v2044 = vld [vmem:[%s0 + $0x7] sm:$0x1]
  %v2045 = vadd.f32 %v2044, %v1891
  %v2046 = vxor.u32 %v2045, 2147483648
  %v2047 = vmul.f32 %v2046, 1.442695
  %v2048 = vpow.pop %v2047
  %v2049 = vadd.f32 %v2048, 1.0
  %v2050 = vrcp.pop %v2049
  %v2051 = vmul.f32 1.0, %v2050
  %v2052 = vld [vmem:[%s1 + $0x7] sm:$0x1]
  %v2053 = vadd.f32 %v2052, %v1966
  %v2054 = vxor.u32 %v2053, 2147483648
  %v2055 = vmul.f32 %v2054, 1.442695
  %v2056 = vpow.pop %v2055
  %v2057 = vadd.f32 %v2056, 1.0
  %v2058 = vrcp.pop %v2057
  %v2059 = vmul.f32 1.0, %v2058
  %v2060 = vld [vmem:[%s2 + $0x7] sm:$0x1]
  %v2061 = vmul.f32 %v2051, %v2041
  %v2062 = vadd.f32 %v2060, %v2061
  %v2063 = vtanh.pop %v2062
  %v2064 = vsub.f32 1.0, %v2059
  %v2065 = vmul.f32 %v2064, %v2063
  %v2066 = vmul.f32 %v2059, %v1814
  %v2067 = vadd.f32 %v2065, %v2066
  %2068 = vst.msk [vmem:[%s10 + $0x7] sm:$0x1] %vm296, %v2067
  %2069 = vst.msk [vmem:[#allocation2] sm:$0x1] %vm296, %v2067
  // Predicated region
  $region46: #{encode_rnn_forward.1} parent=0 // pred_check
    _
  $region47: #{encode_rnn_forward.1} parent=0 // pred_check_branch
    %2071 = sbr.rel (0) target = $region49
  $region48: #{encode_rnn_forward.1} parent=0 // pred_region
    _
  $region49: #{encode_rnn_forward.1} parent=0 // pred_fallthru
    _
  // Predicated region
  $region50: #{encode_rnn_forward.1} parent=0 // pred_check
    _
  $region51: #{encode_rnn_forward.1} parent=0 // pred_check_branch
    %2073 = sbr.rel (0) target = $region53
  $region52: #{encode_rnn_forward.1} parent=0 // pred_region
    _
  $region53: #{encode_rnn_forward.1} parent=0 // pred_fallthru
    _

</llo_original>
